<compile_context>
chip_gen: v7x
topology: tpu7x:2x2x1
jax: 0.10.0
libtpu: 0.0.40
codegen_flags: <defaults>
</compile_context>

<pallas_src>
import functools

import jax
import jax.numpy as jnp
import numpy as np
from jax.experimental import pallas as pl
from jax.experimental.pallas import tpu as pltpu


def _round_up(x, m):
    return ((x + m - 1) // m) * m


# ---------------------------------------------------------------------------
# Phase 1: causal replicate-pad Conv1d over stacked [query; keys], seq-tiled
# with a (K-1)-row carry.  Also emits ||conv||^2 per row, lane-major (1, ts).
# ---------------------------------------------------------------------------
def _conv_kernel(x_ref, w_ref, b_ref, y_ref, sq_ref, carry_ref, *,
                 ksize, din_p, c_p, ts):
    si = pl.program_id(1)
    x = x_ref[0]                      # (ts, din_p) bf16
    w = w_ref[...]                    # (K*din_p, c_p) bf16 (tap-major fused)
    b = b_ref[...]                    # (1, c_p) f32

    if ksize > 1:
        @pl.when(si == 0)
        def _():
            # replicate ('edge') left pad: seed carry with row 0 of this item.
            carry_ref[...] = jnp.broadcast_to(x[0:1, :], (ksize - 1, din_p))

        xpad = jnp.concatenate([carry_ref[...], x], axis=0)  # (ts+K-1, din_p)
        # carry the last K-1 rows for the next sequence tile of this item.
        carry_ref[...] = x[ts - (ksize - 1):, :]
    else:
        xpad = x

    # fuse the K taps into a single MXU contraction of width K*din_p
    xwin = jnp.concatenate([xpad[j:j + ts, :] for j in range(ksize)], axis=-1)
    y = jnp.dot(xwin, w, preferred_element_type=jnp.float32) + b
    ybf = y.astype(jnp.bfloat16)
    y_ref[0] = ybf

    # ||conv||^2 per row from the same bf16-rounded values, emitted directly
    # in lane-major (1, ts) layout (no XLU transpose); only the keys half is
    # consumed downstream but computing it for queries too is negligible.
    yf = ybf.astype(jnp.float32)
    ones = jnp.ones((1, c_p), jnp.float32)
    sq_ref[0] = jax.lax.dot_general(ones, yf * yf, (((1,), (1,)), ((), ())),
                                    preferred_element_type=jnp.float32)


# ---------------------------------------------------------------------------
# Phase 2: flash-style key-tiled online softmax over -Euclidean distance.
# ---------------------------------------------------------------------------
def _attn_kernel(qc_ref, kc_ref, sqk_ref, v_ref, *rest,
                 seq, s_p, tk, has_mask):
    if has_mask:
        mask_ref, o_ref, m_sc, l_sc, sqq_sc, acc_sc = rest
    else:
        o_ref, m_sc, l_sc, sqq_sc, acc_sc = rest

    kv = pl.program_id(2)
    qcb = qc_ref[0]                                     # (tq, c_p) bf16

    @pl.when(kv == 0)
    def _():
        m_sc[...] = jnp.full(m_sc.shape, -jnp.inf, jnp.float32)
        l_sc[...] = jnp.zeros(l_sc.shape, jnp.float32)
        acc_sc[...] = jnp.zeros(acc_sc.shape, jnp.float32)
        qcf = qcb.astype(jnp.float32)
        sqq_sc[...] = jnp.sum(qcf * qcf, axis=-1, keepdims=True)

    kcb = kc_ref[0]                                     # (tk, c_p)  bf16
    sq_k = sqk_ref[0]                                   # (1, tk)    f32
    v = v_ref[0]                                        # (tk, dv_p) bf16

    # bf16 MXU inputs, f32 accumulation
    dots = jax.lax.dot_general(qcb, kcb, (((1,), (1,)), ((), ())),
                               preferred_element_type=jnp.float32)  # (tq, tk)
    d2 = jnp.maximum(sqq_sc[...] + sq_k - 2.0 * dots, 0.0)
    scores = -jnp.sqrt(d2)

    if s_p > seq:
        # mask padded key columns (generated only when S was padded)
        col = kv * tk + jax.lax.broadcasted_iota(jnp.int32, scores.shape, 1)
        scores = jnp.where(col < seq, scores, -jnp.inf)
    if has_mask:
        # fully-masked rows produce NaN, matching the PyTorch module.
        scores = jnp.where(mask_ref[0] == 0, -jnp.inf, scores)

    m_prev = m_sc[...]
    m_new = jnp.maximum(m_prev, jnp.max(scores, axis=-1, keepdims=True))
    alpha = jnp.exp(m_prev - m_new)
    p = jnp.exp(scores - m_new)
    l_sc[...] = alpha * l_sc[...] + jnp.sum(p, axis=-1, keepdims=True)
    acc_sc[...] = alpha * acc_sc[...] + jnp.dot(
        p.astype(jnp.bfloat16), v, preferred_element_type=jnp.float32)
    m_sc[...] = m_new

    @pl.when(kv == pl.num_programs(2) - 1)
    def _():
        # normalize AFTER accumulation, in f32 (EUP approx reciprocal)
        o_ref[0] = (acc_sc[...] *
                    pl.reciprocal(l_sc[...], approx=True)).astype(o_ref.dtype)


@functools.partial(jax.jit, static_argnames=("q_tile", "k_tile", "s_tile"))
def simplex_attention(query, keys, vals, weight, bias, mask=None, *,
                      q_tile=128, k_tile=512, s_tile=512):
    """query/keys: (B, S, Din); vals: (B, S, Dv); weight: (C, Din, K) in torch
    Conv1d layout; bias: (C,); optional mask: (B, S, S). Returns (B, S, Dv)."""
    B, S, Din = query.shape
    Dv = vals.shape[-1]
    C, _, K = weight.shape
    if mask is not None and mask.shape != (B, S, S):
        raise ValueError(f"Expected mask shape {(B, S, S)}, got {mask.shape}")

    f32, bf16 = jnp.float32, jnp.bfloat16
    LANE = 128
    din_p = _round_up(Din, LANE)
    c_p = _round_up(C, LANE)
    dv_p = _round_up(Dv, LANE)

    # --- sequence padding / tile selection ---
    q_tile = _round_up(q_tile, 8)
    k_tile = _round_up(k_tile, LANE)
    s_tile = _round_up(s_tile, 8)
    s8 = _round_up(S, 8)
    if s8 <= s_tile:
        ts = tk = s_p = s8
        tq = min(q_tile, s8)
        if s8 % tq:
            tq = s8
    else:
        tq, tk, ts = q_tile, k_tile, s_tile
        m = int(np.lcm(np.lcm(tq, tk), ts))
        s_p = _round_up(s8, m)
    if K - 1 > ts:
        raise ValueError(f"kernel_size-1 ({K-1}) must be <= seq tile ({ts})")
    nq, nk, ns = s_p // tq, s_p // tk, s_p // ts

    def pad_to(x, shape):
        return jnp.pad(x, [(0, t - s) for s, t in zip(x.shape, shape)])

    # Lane-dense relayout (layout plumbing only).
    q_p = pad_to(query, (B, s_p, din_p)).astype(bf16)
    k_p = pad_to(keys, (B, s_p, din_p)).astype(bf16)
    qk = jnp.concatenate([q_p, k_p], axis=0)            # (2B, s_p, din_p)

    # causal shift of vals hoisted to the wrapper (one-time copy).
    v_shift = jnp.concatenate(
        [jnp.zeros_like(vals[:, :1]), vals[:, :S - 1]], axis=1)
    v_p = pad_to(v_shift, (B, s_p, dv_p)).astype(bf16)

    w_t = jnp.transpose(weight, (2, 1, 0)).astype(f32)   # (K, Din, C)
    w_f = pad_to(w_t, (K, din_p, c_p)).reshape(K * din_p, c_p).astype(bf16)
    b_f = pad_to(bias.reshape(1, C).astype(f32), (1, c_p))

    # ---- Phase 1: conv of stacked [query; keys], seq-tiled ----
    est1 = (2 * (ts * din_p * 2 + K * din_p * c_p * 2 + c_p * 4
                 + ts * c_p * 2 + ts * 4)
            + max(K - 1, 1) * din_p * 2
            + (ts + K) * din_p * 2 + K * ts * din_p * 2 + 2 * ts * c_p * 4)
    vmem1 = min(max(2 * est1, 32 * 2**20), 48 * 2**20)

    conv_kernel = functools.partial(_conv_kernel, ksize=K, din_p=din_p,
                                    c_p=c_p, ts=ts)
    qkc, sq = pl.pallas_call(
        conv_kernel,
        out_shape=(jax.ShapeDtypeStruct((2 * B, s_p, c_p), bf16),
                   jax.ShapeDtypeStruct((2 * B, 1, s_p), f32)),
        grid=(2 * B, ns),
        in_specs=[
            pl.BlockSpec((1, ts, din_p), lambda b, si: (b, si, 0)),
            pl.BlockSpec((K * din_p, c_p), lambda b, si: (0, 0)),
            pl.BlockSpec((1, c_p), lambda b, si: (0, 0)),
        ],
        out_specs=(pl.BlockSpec((1, ts, c_p), lambda b, si: (b, si, 0)),
                   pl.BlockSpec((1, 1, ts), lambda b, si: (b, 0, si))),
        scratch_shapes=[pltpu.VMEM((max(K - 1, 1), din_p), bf16)],
        compiler_params=pltpu.CompilerParams(
            dimension_semantics=("parallel", "arbitrary"),
            vmem_limit_bytes=vmem1),
    )(qk, w_f, b_f)

    # ---- Phase 2: key-tiled online-softmax attention ----
    has_mask = mask is not None
    inputs = [qkc, qkc, sq, v_p]
    in_specs = [
        pl.BlockSpec((1, tq, c_p), lambda b, qi, kv: (b, qi, 0)),       # qc
        pl.BlockSpec((1, tk, c_p), lambda b, qi, kv: (b + B, kv, 0)),   # kc
        pl.BlockSpec((1, 1, tk), lambda b, qi, kv: (b + B, 0, kv)),     # ||kc||^2
        pl.BlockSpec((1, tk, dv_p), lambda b, qi, kv: (b, kv, 0)),      # shifted v
    ]
    if has_mask:
        m_i8 = (mask != 0).astype(jnp.int8)
        m_i8 = jnp.pad(m_i8, ((0, 0), (0, s_p - S), (0, s_p - S)),
                       constant_values=1)
        inputs.append(m_i8)
        in_specs.append(
            pl.BlockSpec((1, tq, tk), lambda b, qi, kv: (b, qi, kv)))

    est2 = (2 * ((tq * c_p + tk * c_p + tk * dv_p + tq * dv_p) * 2 + tk * 4)
            + (2 * tq * tk if has_mask else 0)
            + (tq * dv_p + 3 * tq) * 4
            + 6 * tq * tk * 4)
    vmem2 = min(max(2 * est2, 32 * 2**20), 48 * 2**20)

    attn_kernel = functools.partial(_attn_kernel, seq=S, s_p=s_p, tk=tk,
                                    has_mask=has_mask)
    out = pl.pallas_call(
        attn_kernel,
        out_shape=jax.ShapeDtypeStruct((B, s_p, dv_p), bf16),
        grid=(B, nq, nk),
        in_specs=in_specs,
        out_specs=pl.BlockSpec((1, tq, dv_p), lambda b, qi, kv: (b, qi, 0)),
        scratch_shapes=[pltpu.VMEM((tq, 1), f32),      # running max
                        pltpu.VMEM((tq, 1), f32),      # running sum
                        pltpu.VMEM((tq, 1), f32),      # ||qc||^2
                        pltpu.VMEM((tq, dv_p), f32)],  # accumulator
        compiler_params=pltpu.CompilerParams(
            dimension_semantics=("parallel", "parallel", "arbitrary"),
            vmem_limit_bytes=vmem2),
    )(*inputs)

    return out[:, :S, :Dv].astype(f32)


# ---------------------------------------------------------------------------
# Pure-JAX f32 reference mirroring the PyTorch forward.
# ---------------------------------------------------------------------------
def simplex_attention_ref(query, keys, vals, weight, bias, mask=None):
    B, S, Din = query.shape
    C, _, K = weight.shape
    qp = jnp.pad(query, ((0, 0), (K - 1, 0), (0, 0)), mode="edge")
    kp = jnp.pad(keys, ((0, 0), (K - 1, 0), (0, 0)), mode="edge")

    def conv(x):
        out = bias[None, None, :]
        for j in range(K):
            out = out + jnp.einsum("btd,cd->btc", x[:, j:j + S],
                                   weight[:, :, j])
        return out

    qc, kc = conv(qp), conv(kp)
    d2 = (jnp.sum(qc ** 2, -1)[:, :, None] + jnp.sum(kc ** 2, -1)[:, None, :]
          - 2.0 * jnp.einsum("bqc,bkc->bqk", qc, kc))
    dist = jnp.sqrt(jnp.maximum(d2, 0.0))
    pre = -dist
    if mask is not None:
        pre = jnp.where(mask == 0, -jnp.inf, pre)
    attn = jax.nn.softmax(pre, axis=-1)
    vs = jnp.concatenate([jnp.zeros_like(vals[:, :1]), vals[:, :-1]], axis=1)
    return jnp.einsum("bqk,bkd->bqd", attn, vs)


if __name__ == "__main__":
    # bf16 MXU inputs vs. f32 reference -> bf16-appropriate tolerances.
    tol = dict(rtol=5e-2, atol=5e-2)
    root = jax.random.PRNGKey(0)

    def make_inputs(key, B, S, Din, C, Dv, K):
        kq, kk, kv, kw, kb = jax.random.split(key, 5)
        query = jax.random.normal(kq, (B, S, Din), jnp.float32)
        keys = jax.random.normal(kk, (B, S, Din), jnp.float32)
        vals = jax.random.normal(kv, (B, S, Dv), jnp.float32)
        bound = 1.0 / (Din * K) ** 0.5
        weight = jax.random.uniform(kw, (C, Din, K), jnp.float32, -bound, bound)
        bias = jax.random.uniform(kb, (C,), jnp.float32, -bound, bound)
        return query, keys, vals, weight, bias

    k_small, k_big = jax.random.split(root)

    # --- small case: B=2, S=8, Din=4, C=4, Dv=6, K=3 ---
    B, S, Din, C, Dv, K = 2, 8, 4, 4, 6, 3
    query, keys, vals, weight, bias = make_inputs(k_small, B, S, Din, C, Dv, K)

    out = jax.block_until_ready(
        simplex_attention(query, keys, vals, weight, bias))
    ref = simplex_attention_ref(query, keys, vals, weight, bias)
    np.testing.assert_allclose(np.asarray(out), np.asarray(ref), **tol)

    mask = jnp.broadcast_to(jnp.tril(jnp.ones((S, S), jnp.float32)), (B, S, S))
    out_m = jax.block_until_ready(
        simplex_attention(query, keys, vals, weight, bias, mask))
    ref_m = simplex_attention_ref(query, keys, vals, weight, bias, mask)
    np.testing.assert_allclose(np.asarray(out_m), np.asarray(ref_m), **tol)

    # --- moderate case exercising multi-tile / online-softmax / carry path ---
    B2, S2 = 2, 640
    query2, keys2, vals2, weight2, bias2 = make_inputs(
        k_big, B2, S2, Din, C, Dv, K)
    mask2 = jnp.broadcast_to(jnp.tril(jnp.ones((S2, S2), jnp.float32)),
                             (B2, S2, S2))
    out2 = jax.block_until_ready(
        simplex_attention(query2, keys2, vals2, weight2, bias2, mask2))
    ref2 = simplex_attention_ref(query2, keys2, vals2, weight2, bias2, mask2)
    np.testing.assert_allclose(np.asarray(out2), np.asarray(ref2), **tol)

    print("KERNEL_OK")
</pallas_src>

<mosaic_0001>
module attributes {stable_mosaic.version = 11 : i64} {
  func.func @_attn_kernel(%arg0: i32, %arg1: i32, %arg2: i32, %arg3: memref<1x8x128xbf16, #tpu.memory_space<vmem>>, %arg4: memref<1x8x128xbf16, #tpu.memory_space<vmem>>, %arg5: memref<1x1x8xf32, #tpu.memory_space<vmem>>, %arg6: memref<1x8x128xbf16, #tpu.memory_space<vmem>>, %arg7: memref<1x8x128xbf16, #tpu.memory_space<vmem>>, %arg8: memref<8x1xf32, #tpu.memory_space<vmem>>, %arg9: memref<8x1xf32, #tpu.memory_space<vmem>>, %arg10: memref<8x1xf32, #tpu.memory_space<vmem>>, %arg11: memref<8x128xf32, #tpu.memory_space<vmem>>) attributes {dimension_semantics = [#tpu.dimension_semantics<parallel>, #tpu.dimension_semantics<parallel>, #tpu.dimension_semantics<arbitrary>], iteration_bounds = array<i64: 2, 1, 1>, scalar_prefetch = 0 : i64, scratch_operands = 4 : i64, tpu.core_type = #tpu.core_type<tc>, window_params = [{transform_indices = @transform_0, window_bounds = array<i64: 1, 8, 128>}, {transform_indices = @transform_1, window_bounds = array<i64: 1, 8, 128>}, {transform_indices = @transform_2, window_bounds = array<i64: 1, 1, 8>}, {transform_indices = @transform_3, window_bounds = array<i64: 1, 8, 128>}, {transform_indices = @transform_4, window_bounds = array<i64: 1, 8, 128>}]} {
    %c0 = arith.constant 0 : index
    %c0_0 = arith.constant 0 : index
    %c0_1 = arith.constant 0 : index
    %0 = vector.load %arg3[%c0, %c0_0, %c0_1] : memref<1x8x128xbf16, #tpu.memory_space<vmem>>, vector<1x8x128xbf16>
    %1 = vector.shape_cast %0 : vector<1x8x128xbf16> to vector<8x128xbf16>
    %c0_i32 = arith.constant 0 : i32
    %2 = arith.cmpi eq, %arg2, %c0_i32 : i32
    %3 = arith.extui %2 : i1 to i32
    %c0_i32_2 = arith.constant 0 : i32
    %4 = arith.cmpi ne, %3, %c0_i32_2 : i32
    scf.if %4 {
      %cst_34 = arith.constant 0xFF800000 : f32
      %50 = vector.broadcast %cst_34 : f32 to vector<8x1xf32>
      %c0_35 = arith.constant 0 : index
      %c0_36 = arith.constant 0 : index
      %51 = vector.load %arg8[%c0_35, %c0_36] : memref<8x1xf32, #tpu.memory_space<vmem>>, vector<8x1xf32>
      tpu.vector_store %arg8[%c0_35, %c0_36], %50 {strides = array<i32>} : memref<8x1xf32, #tpu.memory_space<vmem>>, vector<8x1xf32>,
      %cst_37 = arith.constant 0.000000e+00 : f32
      %52 = vector.broadcast %cst_37 : f32 to vector<8x1xf32>
      %c0_38 = arith.constant 0 : index
      %c0_39 = arith.constant 0 : index
      %53 = vector.load %arg9[%c0_38, %c0_39] : memref<8x1xf32, #tpu.memory_space<vmem>>, vector<8x1xf32>
      tpu.vector_store %arg9[%c0_38, %c0_39], %52 {strides = array<i32>} : memref<8x1xf32, #tpu.memory_space<vmem>>, vector<8x1xf32>,
      %cst_40 = arith.constant 0.000000e+00 : f32
      %54 = vector.broadcast %cst_40 : f32 to vector<8x128xf32>
      %c0_41 = arith.constant 0 : index
      %c0_42 = arith.constant 0 : index
      %55 = vector.load %arg11[%c0_41, %c0_42] : memref<8x128xf32, #tpu.memory_space<vmem>>, vector<8x128xf32>
      tpu.vector_store %arg11[%c0_41, %c0_42], %54 {strides = array<i32>} : memref<8x128xf32, #tpu.memory_space<vmem>>, vector<8x128xf32>,
      %56 = arith.extf %1 : vector<8x128xbf16> to vector<8x128xf32>
      %57 = arith.mulf %56, %56 : vector<8x128xf32>
      %cst_43 = arith.constant dense<0.000000e+00> : vector<8xf32>
      %58 = vector.multi_reduction <add>, %57, %cst_43 [1] : vector<8x128xf32> to vector<8xf32>
      %59 = vector.shape_cast %58 : vector<8xf32> to vector<8x1xf32>
      %c0_44 = arith.constant 0 : index
      %c0_45 = arith.constant 0 : index
      %60 = vector.load %arg10[%c0_44, %c0_45] : memref<8x1xf32, #tpu.memory_space<vmem>>, vector<8x1xf32>
      tpu.vector_store %arg10[%c0_44, %c0_45], %59 {strides = array<i32>} : memref<8x1xf32, #tpu.memory_space<vmem>>, vector<8x1xf32>,
    } else {
    }
    %c0_3 = arith.constant 0 : index
    %c0_4 = arith.constant 0 : index
    %c0_5 = arith.constant 0 : index
    %5 = vector.load %arg4[%c0_3, %c0_4, %c0_5] : memref<1x8x128xbf16, #tpu.memory_space<vmem>>, vector<1x8x128xbf16>
    %6 = vector.shape_cast %5 : vector<1x8x128xbf16> to vector<8x128xbf16>
    %c0_6 = arith.constant 0 : index
    %c0_7 = arith.constant 0 : index
    %c0_8 = arith.constant 0 : index
    %7 = vector.load %arg5[%c0_6, %c0_7, %c0_8] : memref<1x1x8xf32, #tpu.memory_space<vmem>>, vector<1x1x8xf32>
    %8 = vector.shape_cast %7 : vector<1x1x8xf32> to vector<1x8xf32>
    %c0_9 = arith.constant 0 : index
    %c0_10 = arith.constant 0 : index
    %c0_11 = arith.constant 0 : index
    %9 = vector.load %arg6[%c0_9, %c0_10, %c0_11] : memref<1x8x128xbf16, #tpu.memory_space<vmem>>, vector<1x8x128xbf16>
    %10 = vector.shape_cast %9 : vector<1x8x128xbf16> to vector<8x128xbf16>
    %cst = arith.constant dense<0.000000e+00> : vector<8x8xf32>
    %11 = tpu.matmul %1, %6, %cst {dimension_numbers = #tpu.dot_dimension_numbers<[1], [1], [0], [0], [0, 0, 1, 0], [], []>} : vector<8x128xbf16>, vector<8x128xbf16>, vector<8x8xf32> -> vector<8x8xf32>
    %c0_12 = arith.constant 0 : index
    %c0_13 = arith.constant 0 : index
    %12 = vector.load %arg10[%c0_12, %c0_13] : memref<8x1xf32, #tpu.memory_space<vmem>>, vector<8x1xf32>
    %13 = vector.broadcast %12 : vector<8x1xf32> to vector<8x8xf32>
    %14 = vector.broadcast %8 : vector<1x8xf32> to vector<8x8xf32>
    %15 = arith.addf %13, %14 : vector<8x8xf32>
    %cst_14 = arith.constant 2.000000e+00 : f32
    %16 = vector.broadcast %cst_14 : f32 to vector<8x8xf32>
    %17 = arith.mulf %16, %11 : vector<8x8xf32>
    %18 = arith.subf %15, %17 : vector<8x8xf32>
    %cst_15 = arith.constant 0.000000e+00 : f32
    %19 = vector.broadcast %cst_15 : f32 to vector<8x8xf32>
    %20 = arith.maximumf %18, %19 : vector<8x8xf32>
    %21 = math.sqrt %20 : vector<8x8xf32>
    %cst_16 = arith.constant 0.000000e+00 : f32
    %22 = vector.broadcast %cst_16 : f32 to vector<8x8xf32>
    %23 = arith.subf %22, %21 : vector<8x8xf32>
    %c0_17 = arith.constant 0 : index
    %c0_18 = arith.constant 0 : index
    %24 = vector.load %arg8[%c0_17, %c0_18] : memref<8x1xf32, #tpu.memory_space<vmem>>, vector<8x1xf32>
    %cst_19 = arith.constant dense<0xFF800000> : vector<8xf32>
    %25 = vector.multi_reduction <maximumf>, %23, %cst_19 [1] : vector<8x8xf32> to vector<8xf32>
    %26 = vector.shape_cast %25 : vector<8xf32> to vector<8x1xf32>
    %27 = arith.maximumf %24, %26 : vector<8x1xf32>
    %28 = arith.subf %24, %27 : vector<8x1xf32>
    %29 = math.exp %28 : vector<8x1xf32>
    %30 = vector.broadcast %27 : vector<8x1xf32> to vector<8x8xf32>
    %31 = arith.subf %23, %30 : vector<8x8xf32>
    %32 = math.exp %31 : vector<8x8xf32>
    %c0_20 = arith.constant 0 : index
    %c0_21 = arith.constant 0 : index
    %33 = vector.load %arg9[%c0_20, %c0_21] : memref<8x1xf32, #tpu.memory_space<vmem>>, vector<8x1xf32>
    %34 = arith.mulf %29, %33 : vector<8x1xf32>
    %cst_22 = arith.constant dense<0.000000e+00> : vector<8xf32>
    %35 = vector.multi_reduction <add>, %32, %cst_22 [1] : vector<8x8xf32> to vector<8xf32>
    %36 = vector.shape_cast %35 : vector<8xf32> to vector<8x1xf32>
    %37 = arith.addf %34, %36 : vector<8x1xf32>
    %c0_23 = arith.constant 0 : index
    %c0_24 = arith.constant 0 : index
    %38 = vector.load %arg9[%c0_23, %c0_24] : memref<8x1xf32, #tpu.memory_space<vmem>>, vector<8x1xf32>
    tpu.vector_store %arg9[%c0_23, %c0_24], %37 {strides = array<i32>} : memref<8x1xf32, #tpu.memory_space<vmem>>, vector<8x1xf32>,
    %c0_25 = arith.constant 0 : index
    %c0_26 = arith.constant 0 : index
    %39 = vector.load %arg11[%c0_25, %c0_26] : memref<8x128xf32, #tpu.memory_space<vmem>>, vector<8x128xf32>
    %40 = vector.broadcast %29 : vector<8x1xf32> to vector<8x128xf32>
    %41 = arith.mulf %40, %39 : vector<8x128xf32>
    %42 = arith.truncf %32 : vector<8x8xf32> to vector<8x8xbf16>
    %cst_27 = arith.constant dense<0.000000e+00> : vector<8x128xf32>
    %43 = tpu.matmul %42, %10, %cst_27 {dimension_numbers = #tpu.dot_dimension_numbers<[1], [0], [0], [1], [0, 0, 1, 1], [], []>} : vector<8x8xbf16>, vector<8x128xbf16>, vector<8x128xf32> -> vector<8x128xf32>
    %44 = arith.addf %41, %43 : vector<8x128xf32>
    %c0_28 = arith.constant 0 : index
    %c0_29 = arith.constant 0 : index
    %45 = vector.load %arg11[%c0_28, %c0_29] : memref<8x128xf32, #tpu.memory_space<vmem>>, vector<8x128xf32>
    tpu.vector_store %arg11[%c0_28, %c0_29], %44 {strides = array<i32>} : memref<8x128xf32, #tpu.memory_space<vmem>>, vector<8x128xf32>,
    %c0_30 = arith.constant 0 : index
    %c0_31 = arith.constant 0 : index
    %46 = vector.load %arg8[%c0_30, %c0_31] : memref<8x1xf32, #tpu.memory_space<vmem>>, vector<8x1xf32>
    tpu.vector_store %arg8[%c0_30, %c0_31], %27 {strides = array<i32>} : memref<8x1xf32, #tpu.memory_space<vmem>>, vector<8x1xf32>,
    %c0_i32_32 = arith.constant 0 : i32
    %47 = arith.cmpi eq, %arg2, %c0_i32_32 : i32
    %48 = arith.extui %47 : i1 to i32
    %c0_i32_33 = arith.constant 0 : i32
    %49 = arith.cmpi ne, %48, %c0_i32_33 : i32
    scf.if %49 {
      %c0_34 = arith.constant 0 : index
      %c0_35 = arith.constant 0 : index
      %50 = vector.load %arg11[%c0_34, %c0_35] : memref<8x128xf32, #tpu.memory_space<vmem>>, vector<8x128xf32>
      %c0_36 = arith.constant 0 : index
      %c0_37 = arith.constant 0 : index
      %51 = vector.load %arg9[%c0_36, %c0_37] : memref<8x1xf32, #tpu.memory_space<vmem>>, vector<8x1xf32>
      %52 = tpu.reciprocal %51 {approx = true} : vector<8x1xf32> -> vector<8x1xf32>
      %53 = vector.broadcast %52 : vector<8x1xf32> to vector<8x128xf32>
      %54 = arith.mulf %50, %53 : vector<8x128xf32>
      %55 = arith.truncf %54 : vector<8x128xf32> to vector<8x128xbf16>
      %c0_38 = arith.constant 0 : index
      %c0_39 = arith.constant 0 : index
      %c0_40 = arith.constant 0 : index
      %56 = vector.load %arg7[%c0_38, %c0_39, %c0_40] : memref<1x8x128xbf16, #tpu.memory_space<vmem>>, vector<1x8x128xbf16>
      %57 = vector.shape_cast %56 : vector<1x8x128xbf16> to vector<8x128xbf16>
      %58 = vector.shape_cast %55 : vector<8x128xbf16> to vector<1x8x128xbf16>
      tpu.vector_store %arg7[%c0_38, %c0_39, %c0_40], %58 {strides = array<i32>} : memref<1x8x128xbf16, #tpu.memory_space<vmem>>, vector<1x8x128xbf16>,
    } else {
    }
    return
  }
  func.func @transform_0(%arg0: i32, %arg1: i32, %arg2: i32) -> (i32, i32, i32) {
    %c0_i32 = arith.constant 0 : i32
    %c0_i32_0 = arith.constant 0 : i32
    return %arg0, %arg1, %c0_i32 : i32, i32, i32
  }
  func.func @transform_1(%arg0: i32, %arg1: i32, %arg2: i32) -> (i32, i32, i32) {
    %c2_i32 = arith.constant 2 : i32
    %0 = arith.addi %arg0, %c2_i32 : i32
    %c0_i32 = arith.constant 0 : i32
    %c0_i32_0 = arith.constant 0 : i32
    return %0, %arg2, %c0_i32 : i32, i32, i32
  }
  func.func @transform_2(%arg0: i32, %arg1: i32, %arg2: i32) -> (i32, i32, i32) {
    %c2_i32 = arith.constant 2 : i32
    %0 = arith.addi %arg0, %c2_i32 : i32
    %c0_i32 = arith.constant 0 : i32
    %c0_i32_0 = arith.constant 0 : i32
    return %0, %c0_i32, %arg2 : i32, i32, i32
  }
  func.func @transform_3(%arg0: i32, %arg1: i32, %arg2: i32) -> (i32, i32, i32) {
    %c0_i32 = arith.constant 0 : i32
    %c0_i32_0 = arith.constant 0 : i32
    return %arg0, %arg2, %c0_i32 : i32, i32, i32
  }
  func.func @transform_4(%arg0: i32, %arg1: i32, %arg2: i32) -> (i32, i32, i32) {
    %c0_i32 = arith.constant 0 : i32
    %c0_i32_0 = arith.constant 0 : i32
    return %arg0, %arg1, %c0_i32 : i32, i32, i32
  }
}

module attributes {stable_mosaic.version = 11 : i64} {
  func.func @_conv_kernel(%arg0: i32, %arg1: i32, %arg2: memref<1x8x128xbf16, #tpu.memory_space<vmem>>, %arg3: memref<384x128xbf16, #tpu.memory_space<vmem>>, %arg4: memref<1x128xf32, #tpu.memory_space<vmem>>, %arg5: memref<1x8x128xbf16, #tpu.memory_space<vmem>>, %arg6: memref<1x1x8xf32, #tpu.memory_space<vmem>>, %arg7: memref<2x128xbf16, #tpu.memory_space<vmem>>) attributes {dimension_semantics = [#tpu.dimension_semantics<parallel>, #tpu.dimension_semantics<arbitrary>], iteration_bounds = array<i64: 4, 1>, scalar_prefetch = 0 : i64, scratch_operands = 1 : i64, tpu.core_type = #tpu.core_type<tc>, window_params = [{transform_indices = @transform_0, window_bounds = array<i64: 1, 8, 128>}, {pipeline_mode = #tpu.pipeline_mode<synchronous>, transform_indices = @transform_1, window_bounds = array<i64: 384, 128>}, {pipeline_mode = #tpu.pipeline_mode<synchronous>, transform_indices = @transform_2, window_bounds = array<i64: 1, 128>}, {transform_indices = @transform_3, window_bounds = array<i64: 1, 8, 128>}, {transform_indices = @transform_4, window_bounds = array<i64: 1, 1, 8>}]} {
    %c0 = arith.constant 0 : index
    %c0_0 = arith.constant 0 : index
    %c0_1 = arith.constant 0 : index
    %0 = vector.load %arg2[%c0, %c0_0, %c0_1] : memref<1x8x128xbf16, #tpu.memory_space<vmem>>, vector<1x8x128xbf16>
    %1 = vector.shape_cast %0 : vector<1x8x128xbf16> to vector<8x128xbf16>
    %c0_2 = arith.constant 0 : index
    %c0_3 = arith.constant 0 : index
    %2 = vector.load %arg3[%c0_2, %c0_3] : memref<384x128xbf16, #tpu.memory_space<vmem>>, vector<384x128xbf16>
    %c0_4 = arith.constant 0 : index
    %c0_5 = arith.constant 0 : index
    %3 = vector.load %arg4[%c0_4, %c0_5] : memref<1x128xf32, #tpu.memory_space<vmem>>, vector<1x128xf32>
    %c0_i32 = arith.constant 0 : i32
    %4 = arith.cmpi eq, %arg1, %c0_i32 : i32
    %5 = arith.extui %4 : i1 to i32
    %c0_i32_6 = arith.constant 0 : i32
    %6 = arith.cmpi ne, %5, %c0_i32_6 : i32
    scf.if %6 {
      %29 = vector.extract_strided_slice %1 {offsets = [0, 0], sizes = [1, 128], strides = [1, 1]} : vector<8x128xbf16> to vector<1x128xbf16>
      %30 = vector.shape_cast %29 : vector<1x128xbf16> to vector<1x128xbf16>
      %31 = vector.broadcast %30 : vector<1x128xbf16> to vector<2x128xbf16>
      %c0_19 = arith.constant 0 : index
      %c0_20 = arith.constant 0 : index
      %32 = vector.load %arg7[%c0_19, %c0_20] : memref<2x128xbf16, #tpu.memory_space<vmem>>, vector<2x128xbf16>
      tpu.vector_store %arg7[%c0_19, %c0_20], %31 {strides = array<i32>} : memref<2x128xbf16, #tpu.memory_space<vmem>>, vector<2x128xbf16>,
    } else {
    }
    %c0_7 = arith.constant 0 : index
    %c0_8 = arith.constant 0 : index
    %7 = vector.load %arg7[%c0_7, %c0_8] : memref<2x128xbf16, #tpu.memory_space<vmem>>, vector<2x128xbf16>
    %8 = tpu.concatenate %7, %1 in 0 : vector<2x128xbf16>, vector<8x128xbf16> -> vector<10x128xbf16>
    %9 = vector.extract_strided_slice %1 {offsets = [6, 0], sizes = [2, 128], strides = [1, 1]} : vector<8x128xbf16> to vector<2x128xbf16>
    %c0_9 = arith.constant 0 : index
    %c0_10 = arith.constant 0 : index
    %10 = vector.load %arg7[%c0_9, %c0_10] : memref<2x128xbf16, #tpu.memory_space<vmem>>, vector<2x128xbf16>
    tpu.vector_store %arg7[%c0_9, %c0_10], %9 {strides = array<i32>} : memref<2x128xbf16, #tpu.memory_space<vmem>>, vector<2x128xbf16>,
    %11 = vector.extract_strided_slice %8 {offsets = [0, 0], sizes = [8, 128], strides = [1, 1]} : vector<10x128xbf16> to vector<8x128xbf16>
    %12 = vector.extract_strided_slice %8 {offsets = [1, 0], sizes = [8, 128], strides = [1, 1]} : vector<10x128xbf16> to vector<8x128xbf16>
    %13 = vector.extract_strided_slice %8 {offsets = [2, 0], sizes = [8, 128], strides = [1, 1]} : vector<10x128xbf16> to vector<8x128xbf16>
    %14 = tpu.concatenate %11, %12, %13 in 1 : vector<8x128xbf16>, vector<8x128xbf16>, vector<8x128xbf16> -> vector<8x384xbf16>
    %cst = arith.constant dense<0.000000e+00> : vector<8x128xf32>
    %15 = tpu.matmul %14, %2, %cst {dimension_numbers = #tpu.dot_dimension_numbers<[1], [0], [0], [1], [0, 0, 1, 1], [], []>} : vector<8x384xbf16>, vector<384x128xbf16>, vector<8x128xf32> -> vector<8x128xf32>
    %16 = vector.broadcast %3 : vector<1x128xf32> to vector<8x128xf32>
    %17 = arith.addf %15, %16 : vector<8x128xf32>
    %18 = arith.truncf %17 : vector<8x128xf32> to vector<8x128xbf16>
    %c0_11 = arith.constant 0 : index
    %c0_12 = arith.constant 0 : index
    %c0_13 = arith.constant 0 : index
    %19 = vector.load %arg5[%c0_11, %c0_12, %c0_13] : memref<1x8x128xbf16, #tpu.memory_space<vmem>>, vector<1x8x128xbf16>
    %20 = vector.shape_cast %19 : vector<1x8x128xbf16> to vector<8x128xbf16>
    %21 = vector.shape_cast %18 : vector<8x128xbf16> to vector<1x8x128xbf16>
    tpu.vector_store %arg5[%c0_11, %c0_12, %c0_13], %21 {strides = array<i32>} : memref<1x8x128xbf16, #tpu.memory_space<vmem>>, vector<1x8x128xbf16>,
    %22 = arith.extf %18 : vector<8x128xbf16> to vector<8x128xf32>
    %cst_14 = arith.constant 1.000000e+00 : f32
    %23 = vector.broadcast %cst_14 : f32 to vector<1x128xf32>
    %24 = arith.mulf %22, %22 : vector<8x128xf32>
    %cst_15 = arith.constant dense<0.000000e+00> : vector<1x8xf32>
    %25 = tpu.matmul %23, %24, %cst_15 {dimension_numbers = #tpu.dot_dimension_numbers<[1], [1], [0], [0], [0, 0, 1, 0], [], []>} : vector<1x128xf32>, vector<8x128xf32>, vector<1x8xf32> -> vector<1x8xf32>
    %c0_16 = arith.constant 0 : index
    %c0_17 = arith.constant 0 : index
    %c0_18 = arith.constant 0 : index
    %26 = vector.load %arg6[%c0_16, %c0_17, %c0_18] : memref<1x1x8xf32, #tpu.memory_space<vmem>>, vector<1x1x8xf32>
    %27 = vector.shape_cast %26 : vector<1x1x8xf32> to vector<1x8xf32>
    %28 = vector.shape_cast %25 : vector<1x8xf32> to vector<1x1x8xf32>
    tpu.vector_store %arg6[%c0_16, %c0_17, %c0_18], %28 {strides = array<i32>} : memref<1x1x8xf32, #tpu.memory_space<vmem>>, vector<1x1x8xf32>,
    return
  }
  func.func @transform_0(%arg0: i32, %arg1: i32) -> (i32, i32, i32) {
    %c0_i32 = arith.constant 0 : i32
    %c0_i32_0 = arith.constant 0 : i32
    return %arg0, %arg1, %c0_i32 : i32, i32, i32
  }
  func.func @transform_1(%arg0: i32, %arg1: i32) -> (i32, i32) {
    %c0_i32 = arith.constant 0 : i32
    %c0_i32_0 = arith.constant 0 : i32
    %c0_i32_1 = arith.constant 0 : i32
    return %c0_i32, %c0_i32_0 : i32, i32
  }
  func.func @transform_2(%arg0: i32, %arg1: i32) -> (i32, i32) {
    %c0_i32 = arith.constant 0 : i32
    %c0_i32_0 = arith.constant 0 : i32
    %c0_i32_1 = arith.constant 0 : i32
    return %c0_i32, %c0_i32_0 : i32, i32
  }
  func.func @transform_3(%arg0: i32, %arg1: i32) -> (i32, i32, i32) {
    %c0_i32 = arith.constant 0 : i32
    %c0_i32_0 = arith.constant 0 : i32
    return %arg0, %arg1, %c0_i32 : i32, i32, i32
  }
  func.func @transform_4(%arg0: i32, %arg1: i32) -> (i32, i32, i32) {
    %c0_i32 = arith.constant 0 : i32
    %c0_i32_0 = arith.constant 0 : i32
    return %arg0, %c0_i32, %arg1 : i32, i32, i32
  }
}

</mosaic_0001>

<llo_original>
// kernel: simplex_attention.3
$region0: #{simplex_attention.3}
  #allocation0 [shape = 'u32[]', space=smem, size = 0x4, offset = 0x4, fixed_abs, tag = 'smem constant byte address 0x4 - core index']
  #allocation1 [shape = 'u32[144,128]{1,0:T(1,128)}', space=vmem, size = 0x12000, scoped, tag = 'internal scratch']
  #allocation2 [shape = 'f32[8,1]{1,0:T(8,128)}', space=vmem, size = 0x1000, scoped, tag = 'scratch operand']
  #allocation3 [shape = 'f32[8,1]{1,0:T(8,128)}', space=vmem, size = 0x1000, scoped, tag = 'scratch operand']
  #allocation4 [shape = 'f32[8,1]{1,0:T(8,128)}', space=vmem, size = 0x1000, scoped, tag = 'scratch operand']
  #allocation5 [shape = 'f32[8,128]{1,0:T(8,128)}', space=vmem, size = 0x1000, scoped, tag = 'scratch operand']
  %s0 = inlined_call_operand.vmem [shape: bf16[4,8,128], index: 0, kind: input, shape index: {}, may-alias: {0,1}]
  %s1 = inlined_call_operand.vmem [shape: bf16[4,8,128], index: 1, kind: input, shape index: {}, may-alias: {0,1}]
  %s2 = inlined_call_operand.vmem [shape: f32[4,1,8], index: 2, kind: input, shape index: {}]
  %s3 = inlined_call_operand.vmem [shape: bf16[2,8,128], index: 3, kind: input, shape index: {}]
  %s4 = inlined_call_operand.vmem [shape: bf16[2,8,128], index: 4, kind: output, shape index: {}]
  %s5 = sld [smem:[#allocation0]]
  $region57: #{simplex_attention.3} parent=0
    _
  %s7 = ssub.s32 1, %s5
  %s8 = scalar_select 0, %s7, %s5
  loop: start=0, step=1, limit=4
  $region2: #{simplex_attention.3} parent=0 // loop_pre_header
    _
  $region3: #{simplex_attention.3} parent=0 // loop_header
    %s10 = sphi 0, %s14
    %p11 = scmp.ge.s32.totalorder %s10, 4
    %s17 = sphi 0, %s36
    %s18 = sphi 0, %s32
    %s19 = sphi 0, %s28
    %s20 = sphi 0, %s17
    %s21 = sphi 0, %s18
    %s22 = sphi 0, %s19
    %s23 = sphi 0, %s20
    %s24 = sphi 0, %s21
    %s25 = sphi 0, %s22
    %s41 = sphi 0, %s43
    %s44 = sphi 0, %s41
    %s45 = sphi 0, %s44
    %s61 = sphi 0, %s45
    %s71 = sphi 0, %s73
    %s74 = sphi 0, %s71
    %s75 = sphi 0, %s74
    %s91 = sphi 0, %s75
    %s101 = sphi 0, %s103
    %s104 = sphi 0, %s101
    %s105 = sphi 0, %s104
    %s121 = sphi 0, %s105
    %s129 = sphi 0, %s131
    %s132 = sphi 0, %s129
    %s133 = sphi 0, %s132
    %s149 = sphi 0, %s133
    %s157 = sphi 0, %s159
    %s160 = sphi 0, %s157
    %s161 = sphi 0, %s160
    %s177 = sphi 0, %s161
  $region4: #{simplex_attention.3} parent=0 // loop_header_branch
    %13 = sbr.rel (%p11) target = $region8
  $region5: #{simplex_attention.3} parent=0 // loop_body
    %s15 = ssub.s32 %s10, 1
    %s16 = ssub.s32 %s10, 2
    %s26 = sadd.s32 1, %s19
    %p27 = scmp.ge.s32.totalorder %s26, 1
    %s28 = scalar_select %p27, 0, %s26
    %s29 = sadd.s32 1, %s18
    %s30 = scalar_select %p27, %s29, %s18
    %p31 = scmp.ge.s32.totalorder %s30, 1
    %s32 = scalar_select %p31, 0, %s30
    %s33 = sadd.s32 1, %s17
    %s34 = scalar_select %p31, %s33, %s17
    %p35 = scmp.ge.s32.totalorder %s34, 2
    %s36 = scalar_select %p35, 0, %s34
    %s37 = ssub.s32 %s17, %s36
    %s38 = ssub.s32 %s18, %s32
    %s39 = sor.u32 %s37, %s38
    %p40 = scmp.eq.s32.totalorder %s39, 0
    %s42 = sadd.s32 %s41, 1
    %s43 = scalar_select %p40, %s41, %s42
    %p46 = pneg %p40
    %p47 = scmp.eq.s32.totalorder %s10, 1
    %p48 = por %p46, %p47
    %p49 = scmp.ne.s32.totalorder %s41, %s44
    %p50 = scmp.eq.s32.totalorder %s10, 0
    %p51 = por %p49, %p50
    %p52 = scmp.ne.s32.totalorder %s41, %s44
    %p53 = scmp.eq.s32.totalorder %s15, 1
    %p54 = por %p52, %p53
    %p55 = scmp.ne.s32.totalorder %s44, %s45
    %p56 = scmp.eq.s32.totalorder %s15, 0
    %p57 = por %p55, %p56
    %p58 = scmp.ne.s32.totalorder %s44, %s45
    %p59 = scmp.eq.s32.totalorder %s16, 1
    %p60 = por %p58, %p59
    %p62 = scmp.ne.s32.totalorder %s45, %s61
    %p63 = scmp.eq.s32.totalorder %s16, 0
    %p64 = por %p62, %p63
    %s65 = sadd.s32 %s17, 2
    %s66 = sadd.s32 %s36, 2
    %s67 = ssub.s32 %s65, %s66
    %s68 = ssub.s32 %s19, %s28
    %s69 = sor.u32 %s67, %s68
    %p70 = scmp.eq.s32.totalorder %s69, 0
    %s72 = sadd.s32 %s71, 1
    %s73 = scalar_select %p70, %s71, %s72
    %p76 = pneg %p70
    %p77 = scmp.eq.s32.totalorder %s10, 1
    %p78 = por %p76, %p77
    %p79 = scmp.ne.s32.totalorder %s71, %s74
    %p80 = scmp.eq.s32.totalorder %s10, 0
    %p81 = por %p79, %p80
    %p82 = scmp.ne.s32.totalorder %s71, %s74
    %p83 = scmp.eq.s32.totalorder %s15, 1
    %p84 = por %p82, %p83
    %p85 = scmp.ne.s32.totalorder %s74, %s75
    %p86 = scmp.eq.s32.totalorder %s15, 0
    %p87 = por %p85, %p86
    %p88 = scmp.ne.s32.totalorder %s74, %s75
    %p89 = scmp.eq.s32.totalorder %s16, 1
    %p90 = por %p88, %p89
    %p92 = scmp.ne.s32.totalorder %s75, %s91
    %p93 = scmp.eq.s32.totalorder %s16, 0
    %p94 = por %p92, %p93
    %s95 = sadd.s32 %s17, 2
    %s96 = sadd.s32 %s36, 2
    %s97 = ssub.s32 %s95, %s96
    %s98 = ssub.s32 %s19, %s28
    %s99 = sor.u32 %s97, %s98
    %p100 = scmp.eq.s32.totalorder %s99, 0
    %s102 = sadd.s32 %s101, 1
    %s103 = scalar_select %p100, %s101, %s102
    %p106 = pneg %p100
    %p107 = scmp.eq.s32.totalorder %s10, 1
    %p108 = por %p106, %p107
    %p109 = scmp.ne.s32.totalorder %s101, %s104
    %p110 = scmp.eq.s32.totalorder %s10, 0
    %p111 = por %p109, %p110
    %p112 = scmp.ne.s32.totalorder %s101, %s104
    %p113 = scmp.eq.s32.totalorder %s15, 1
    %p114 = por %p112, %p113
    %p115 = scmp.ne.s32.totalorder %s104, %s105
    %p116 = scmp.eq.s32.totalorder %s15, 0
    %p117 = por %p115, %p116
    %p118 = scmp.ne.s32.totalorder %s104, %s105
    %p119 = scmp.eq.s32.totalorder %s16, 1
    %p120 = por %p118, %p119
    %p122 = scmp.ne.s32.totalorder %s105, %s121
    %p123 = scmp.eq.s32.totalorder %s16, 0
    %p124 = por %p122, %p123
    %s125 = ssub.s32 %s17, %s36
    %s126 = ssub.s32 %s19, %s28
    %s127 = sor.u32 %s125, %s126
    %p128 = scmp.eq.s32.totalorder %s127, 0
    %s130 = sadd.s32 %s129, 1
    %s131 = scalar_select %p128, %s129, %s130
    %p134 = pneg %p128
    %p135 = scmp.eq.s32.totalorder %s10, 1
    %p136 = por %p134, %p135
    %p137 = scmp.ne.s32.totalorder %s129, %s132
    %p138 = scmp.eq.s32.totalorder %s10, 0
    %p139 = por %p137, %p138
    %p140 = scmp.ne.s32.totalorder %s129, %s132
    %p141 = scmp.eq.s32.totalorder %s15, 1
    %p142 = por %p140, %p141
    %p143 = scmp.ne.s32.totalorder %s132, %s133
    %p144 = scmp.eq.s32.totalorder %s15, 0
    %p145 = por %p143, %p144
    %p146 = scmp.ne.s32.totalorder %s132, %s133
    %p147 = scmp.eq.s32.totalorder %s16, 1
    %p148 = por %p146, %p147
    %p150 = scmp.ne.s32.totalorder %s133, %s149
    %p151 = scmp.eq.s32.totalorder %s16, 0
    %p152 = por %p150, %p151
    %s153 = ssub.s32 %s17, %s36
    %s154 = ssub.s32 %s18, %s32
    %s155 = sor.u32 %s153, %s154
    %p156 = scmp.eq.s32.totalorder %s155, 0
    %s158 = sadd.s32 %s157, 1
    %s159 = scalar_select %p156, %s157, %s158
    %p162 = pneg %p156
    %p163 = scmp.eq.s32.totalorder %s10, 1
    %p164 = por %p162, %p163
    %p165 = scmp.ne.s32.totalorder %s157, %s160
    %p166 = scmp.eq.s32.totalorder %s10, 0
    %p167 = por %p165, %p166
    %p168 = scmp.ne.s32.totalorder %s157, %s160
    %p169 = scmp.eq.s32.totalorder %s15, 1
    %p170 = por %p168, %p169
    %p171 = scmp.ne.s32.totalorder %s160, %s161
    %p172 = scmp.eq.s32.totalorder %s15, 0
    %p173 = por %p171, %p172
    %p174 = scmp.ne.s32.totalorder %s160, %s161
    %p175 = scmp.eq.s32.totalorder %s16, 1
    %p176 = por %p174, %p175
    %p178 = scmp.ne.s32.totalorder %s161, %s177
    %p179 = scmp.eq.s32.totalorder %s16, 0
    %p180 = por %p178, %p179
    %p181 = scmp.le.s32.totalorder 1, %s10
    %p182 = scmp.lt.s32.totalorder %s10, 3
    %p183 = pnand %p181, %p182
    %p184 = pneg %p183
    // Predicated region
    $region9: #{simplex_attention.3} parent=5 // pred_check
      _
    $region10: #{simplex_attention.3} parent=5 // pred_check_branch
      %186 = sbr.rel (%p183) target = $region12
    $region11: #{simplex_attention.3} parent=5 // pred_region
      %s187 = ssub.s32 %s10, 1
    $region12: #{simplex_attention.3} parent=5 // pred_fallthru
      _
    %p188 = scmp.lt.s32.totalorder %s10, 2
    // Predicated region
    $region13: #{simplex_attention.3} parent=5 // pred_check
      %p189 = pneg %p188
    $region14: #{simplex_attention.3} parent=5 // pred_check_branch
      %191 = sbr.rel (%p189) target = $region16
    $region15: #{simplex_attention.3} parent=5 // pred_region
      // Predicated region
      $region17: #{simplex_attention.3} parent=15 // pred_check
        %p192 = pneg %p51
      $region18: #{simplex_attention.3} parent=15 // pred_check_branch
        %194 = sbr.rel (%p192) target = $region20
      $region19: #{simplex_attention.3} parent=15 // pred_region
        %p195 = scmp.lt.s32.totalorder %s17, 3
        %s196 = scalar_select %p195, %s17, 3
        %p197 = scmp.lt.s32.totalorder %s18, 0
        %s198 = scalar_select %p197, %s18, 0
        %s199 = sadd.s32 %s198, %s196
        %s200 = smul.addr %s199, 4
        %s201 = scalar_lea.vmem %s0, %s200
      $region20: #{simplex_attention.3} parent=15 // pred_fallthru
        _
      // Predicated region
      $region21: #{simplex_attention.3} parent=15 // pred_check
        %p202 = pneg %p81
      $region22: #{simplex_attention.3} parent=15 // pred_check_branch
        %204 = sbr.rel (%p202) target = $region24
      $region23: #{simplex_attention.3} parent=15 // pred_region
        %s205 = sadd.s32 %s17, 2
        %p206 = scmp.lt.s32.totalorder %s205, 3
        %s207 = scalar_select %p206, %s205, 3
        %p208 = scmp.lt.s32.totalorder %s19, 0
        %s209 = scalar_select %p208, %s19, 0
        %s210 = sadd.s32 %s209, %s207
        %s211 = smul.addr %s210, 4
        %s212 = scalar_lea.vmem %s1, %s211
        %s213 = sadd.s32 %s17, 2
      $region24: #{simplex_attention.3} parent=15 // pred_fallthru
        _
      // Predicated region
      $region25: #{simplex_attention.3} parent=15 // pred_check
        %p214 = pneg %p111
      $region26: #{simplex_attention.3} parent=15 // pred_check_branch
        %216 = sbr.rel (%p214) target = $region28
      $region27: #{simplex_attention.3} parent=15 // pred_region
        %s217 = sadd.s32 %s17, 2
        %p218 = scmp.lt.s32.totalorder %s217, 3
        %s219 = scalar_select %p218, %s217, 3
        %p220 = scmp.lt.s32.totalorder %s19, 0
        %s221 = scalar_select %p220, %s19, 0
        %s222 = sadd.s32 %s221, %s219
        %s223 = scalar_lea.vmem %s2, %s222
        %s224 = sadd.s32 %s17, 2
      $region28: #{simplex_attention.3} parent=15 // pred_fallthru
        _
      // Predicated region
      $region29: #{simplex_attention.3} parent=15 // pred_check
        %p225 = pneg %p139
      $region30: #{simplex_attention.3} parent=15 // pred_check_branch
        %227 = sbr.rel (%p225) target = $region32
      $region31: #{simplex_attention.3} parent=15 // pred_region
        %p228 = scmp.lt.s32.totalorder %s17, 1
        %s229 = scalar_select %p228, %s17, 1
        %p230 = scmp.lt.s32.totalorder %s19, 0
        %s231 = scalar_select %p230, %s19, 0
        %s232 = sadd.s32 %s231, %s229
        %s233 = smul.addr %s232, 4
        %s234 = scalar_lea.vmem %s3, %s233
      $region32: #{simplex_attention.3} parent=15 // pred_fallthru
        _
    $region16: #{simplex_attention.3} parent=5 // pred_fallthru
      _
    %p235 = scmp.le.s32.totalorder 1, %s10
    %p236 = scmp.lt.s32.totalorder %s10, 3
    %p237 = pnand %p235, %p236
    %p238 = pneg %p237
    // Predicated region
    $region33: #{simplex_attention.3} parent=5 // pred_check
      _
    $region34: #{simplex_attention.3} parent=5 // pred_check_branch
      %240 = sbr.rel (%p237) target = $region36
    $region35: #{simplex_attention.3} parent=5 // pred_region
      %s241 = ssub.s32 %s10, 1
      %p242 = scmp.lt.s32.totalorder %s20, 3
      %s243 = scalar_select %p242, %s20, 3
      %p244 = scmp.lt.s32.totalorder %s21, 0
      %s245 = scalar_select %p244, %s21, 0
      %s246 = sadd.s32 %s245, %s243
      %s247 = smul.addr %s246, 4
      %s248 = scalar_lea.vmem %s0, %s247
      %p249 = pneg %p57
      %p250 = pneg %p54
      %s251 = sadd.s32 %s20, 2
      %p252 = scmp.lt.s32.totalorder %s251, 3
      %s253 = scalar_select %p252, %s251, 3
      %p254 = scmp.lt.s32.totalorder %s22, 0
      %s255 = scalar_select %p254, %s22, 0
      %s256 = sadd.s32 %s255, %s253
      %s257 = smul.addr %s256, 4
      %s258 = scalar_lea.vmem %s1, %s257
      %p259 = pneg %p87
      %p260 = pneg %p84
      %s261 = sadd.s32 %s20, 2
      %p262 = scmp.lt.s32.totalorder %s261, 3
      %s263 = scalar_select %p262, %s261, 3
      %p264 = scmp.lt.s32.totalorder %s22, 0
      %s265 = scalar_select %p264, %s22, 0
      %s266 = sadd.s32 %s265, %s263
      %s267 = scalar_lea.vmem %s2, %s266
      %p268 = pneg %p117
      %p269 = pneg %p114
      %p270 = scmp.lt.s32.totalorder %s20, 1
      %s271 = scalar_select %p270, %s20, 1
      %p272 = scmp.lt.s32.totalorder %s22, 0
      %s273 = scalar_select %p272, %s22, 0
      %s274 = sadd.s32 %s273, %s271
      %s275 = smul.addr %s274, 4
      %s276 = scalar_lea.vmem %s3, %s275
      %p277 = pneg %p145
      %p278 = pneg %p142
      %p279 = pneg %p173
      %p280 = pneg %p170
      %p281 = scmp.lt.s32.totalorder %s20, 1
      %s282 = scalar_select %p281, %s20, 1
      %p283 = scmp.lt.s32.totalorder %s21, 0
      %s284 = scalar_select %p283, %s21, 0
      %s285 = sadd.s32 %s284, %s282
      %s286 = smul.addr %s285, 4
      %s287 = scalar_lea.vmem %s4, %s286
      %p288 = scmp.lt.s32.totalorder %s20, 3
      %s289 = scalar_select %p288, %s20, 3
      %p290 = scmp.lt.s32.totalorder %s21, 0
      %s291 = scalar_select %p290, %s21, 0
      %s292 = sadd.s32 %s291, %s289
      %s293 = smul.addr %s292, 4
      %s294 = scalar_lea.vmem %s0, %s293
      %s295 = sadd.s32 %s20, 2
      %p296 = scmp.lt.s32.totalorder %s295, 3
      %s297 = scalar_select %p296, %s295, 3
      %p298 = scmp.lt.s32.totalorder %s22, 0
      %s299 = scalar_select %p298, %s22, 0
      %s300 = sadd.s32 %s299, %s297
      %s301 = smul.addr %s300, 4
      %s302 = scalar_lea.vmem %s1, %s301
      %s303 = sadd.s32 %s20, 2
      %s304 = sadd.s32 %s20, 2
      %p305 = scmp.lt.s32.totalorder %s304, 3
      %s306 = scalar_select %p305, %s304, 3
      %p307 = scmp.lt.s32.totalorder %s22, 0
      %s308 = scalar_select %p307, %s22, 0
      %s309 = sadd.s32 %s308, %s306
      %s310 = scalar_lea.vmem %s2, %s309
      %s311 = sadd.s32 %s20, 2
      %p312 = scmp.lt.s32.totalorder %s20, 1
      %s313 = scalar_select %p312, %s20, 1
      %p314 = scmp.lt.s32.totalorder %s22, 0
      %s315 = scalar_select %p314, %s22, 0
      %s316 = sadd.s32 %s315, %s313
      %s317 = smul.addr %s316, 4
      %s318 = scalar_lea.vmem %s3, %s317
      %p319 = scmp.lt.s32.totalorder %s20, 1
      %s320 = scalar_select %p319, %s20, 1
      %p321 = scmp.lt.s32.totalorder %s21, 0
      %s322 = scalar_select %p321, %s21, 0
      %s323 = sadd.s32 %s322, %s320
      %s324 = smul.addr %s323, 4
      %s325 = scalar_lea.vmem %s4, %s324
      %v327 = vld [vmem:[%s294] sm:$0xf]
      %p328 = scmp.eq.s32.totalorder %s22, 0
      // Predicated region
      $region37: #{simplex_attention.3} parent=35 // pred_check
        %p329 = pneg %p328
      $region38: #{simplex_attention.3} parent=35 // pred_check_branch
        %331 = sbr.rel (%p329) target = $region40
      $region39: #{simplex_attention.3} parent=35 // pred_region
        %vm332 = vcmask 7168
        %333 = vst.msk [vmem:[#allocation2] sm:$0xff] %vm332, -inf
        %334 = vst.msk [vmem:[#allocation3] sm:$0xff] %vm332, 0.0
        %335 = vst [vmem:[#allocation5] sm:$0xff] 0.0
        %v336 = vunpack.c.l.bf16 %v327
        %v337 = vmul.f32 %v336, %v336
        %338 = vadd.xlane.f32.xlu0 %v337
        %v339 = vpop.xlane.xlu0 %338
        %340 = vst.msk [vmem:[#allocation4] sm:$0xff] %vm332, %v339
      $region40: #{simplex_attention.3} parent=35 // pred_fallthru
        _
      %v341 = vld [vmem:[%s302] sm:$0xf]
      %v342 = vld [vmem:[%s310] sm:$0x1]
      %v343 = vld [vmem:[%s318] sm:$0xf]
      %344 = vmatprep.subr.bf16.mxu0 0
      %345 = vmatpush1.bf16.xpose.msra.mxu0 %v341
      %346 = vmatprep.subr.bf16.mxu0 0
      %347 = vmatpush1.bf16.xpose.msra.mxu0 0
      %348 = vmatprep.subr.bf16.mxu0 0
      %349 = vmatpush1.bf16.xpose.msra.mxu0 0
      %350 = vmatprep.subr.bf16.mxu0 0
      %351 = vmatpush1.bf16.xpose.msra.mxu0 0
      %352 = vmatprep.subr.bf16.mxu0 0
      %353 = vmatpush1.bf16.xpose.msra.mxu0 0
      %354 = vmatprep.subr.bf16.mxu0 0
      %355 = vmatpush1.bf16.xpose.msra.mxu0 0
      %356 = vmatprep.subr.bf16.mxu0 0
      %357 = vmatpush1.bf16.xpose.msra.mxu0 0
      %358 = vmatprep.subr.bf16.mxu0 0
      %359 = vmatpush1.bf16.xpose.msra.mxu0 0
      %360 = vmatprep.subr.bf16.mxu0 0
      %361 = vmatpush1.bf16.xpose.msra.mxu0 0
      %362 = vmatprep.subr.bf16.mxu0 0
      %363 = vmatpush1.bf16.xpose.msra.mxu0 0
      %364 = vmatprep.subr.bf16.mxu0 0
      %365 = vmatpush1.bf16.xpose.msra.mxu0 0
      %366 = vmatprep.subr.bf16.mxu0 0
      %367 = vmatpush1.bf16.xpose.msra.mxu0 0
      %368 = vmatprep.subr.bf16.mxu0 0
      %369 = vmatpush1.bf16.xpose.msra.mxu0 0
      %370 = vmatprep.subr.bf16.mxu0 0
      %371 = vmatpush1.bf16.xpose.msra.mxu0 0
      %372 = vmatprep.subr.bf16.mxu0 0
      %373 = vmatpush1.bf16.xpose.msra.mxu0 0
      %374 = vmatprep.subr.bf16.mxu0 0
      %375 = vmatpush1.bf16.xpose.msra.mxu0 0
      %376 = vmatprep.mubr.bf16.mxu0 0
      %377 = vmatmul.mubr.bf16.gmra.mrb[0].mxu0 %v327
      %v378 = vpop.f32.mrb[0].mxu0
      %v379 = vadd.f32 0.0, %v378
      %v380 = vpop.f32.mrb[0].mxu0
      %v381 = vpop.f32.mrb[0].mxu0
      %v382 = vpop.f32.mrb[0].mxu0
      %383 = vdwg.mxu0
      %v384 = vld [vmem:[#allocation4] sm:$0xff]
      %386 = vset.pattern.permute.xlu0 0
      %387 = vperm.xlu0 %386, %v384
      %v388 = vpop.permute.xlu0 %387
      %v391 = vlaneseq
      %v392 = vshrl.u32 %v391, 7
      %v393 = vsub.s32 0, %v392
      %v394 = vrot.slane %v342, %v393
      %v396 = vadd.f32 %v388, %v394
      %v397 = vmul.f32 %v379, 2.0
      %v398 = vsub.f32 %v396, %v397
      %v399 = vmax.f32 %v398, 0.0
      %v400 = vrsqrt.pop %v399
      %v401 = vmul.f32 %v399, %v400
      %vm402 = vcmp.eq.f32.partialorder %v399, inf
      %v403 = vsel %vm402, %v399, %v401
      %vm404 = vcmp.eq.f32.partialorder %v399, 0.0
      %v405 = vand.u32 %v399, 2147483648
      %v406 = vsel %vm404, %v405, %v403
      %v407 = vsub.f32 0.0, %v406
      %v408 = vld [vmem:[#allocation2] sm:$0xff]
      %vm409 = vcmask 64512
      %v410 = vsel %vm409, %v407, -inf
      %411 = vmax.xlane.f32.xlu0 %v410
      %v412 = vpop.xlane.xlu0 %411
      %v413 = vmax.f32 %v408, %v412
      %v414 = vsub.f32 %v408, %v413
      %v415 = vmul.f32 %v414, 1.442695
      %v416 = vpow.pop %v415
      %418 = vset.pattern.permute.xlu0 0
      %419 = vperm.xlu0 %418, %v413
      %v420 = vpop.permute.xlu0 %419
      %v422 = vsub.f32 %v407, %v420
      %v423 = vmul.f32 %v422, 1.442695
      %v424 = vpow.pop %v423
      %v425 = vld [vmem:[#allocation3] sm:$0xff]
      %v426 = vmul.f32 %v416, %v425
      %v427 = vsel %vm409, %v424, 0.0
      %428 = vadd.xlane.f32.xlu0 %v427
      %v429 = vpop.xlane.xlu0 %428
      %v430 = vadd.f32 %v426, %v429
      %vm431 = vcmask 7168
      %432 = vst.msk [vmem:[#allocation3] sm:$0xff] %vm431, %v430
      %v433 = vld [vmem:[#allocation5] sm:$0xff]
      %435 = vset.pattern.permute.xlu0 0
      %436 = vperm.xlu0 %435, %v416
      %v437 = vpop.permute.xlu0 %436
      %v439 = vmul.f32 %v437, %v433
      %v440 = vpack.c.bf16 %v424, %v424
      %v442 = vsel %vm409, %v440, 0
      %vm444 = vcmask 1043456
      %v446 = vsel %vm444, %v343, 0
      %448 = vmatprep.subr.bf16.mxu0 0
      %449 = vmatpush1.bf16.msra.mxu0 %v446
      %450 = vmatprep.subr.bf16.mxu0 0
      %451 = vmatpush1.bf16.msra.mxu0 0
      %452 = vmatprep.subr.bf16.mxu0 0
      %453 = vmatpush1.bf16.msra.mxu0 0
      %454 = vmatprep.subr.bf16.mxu0 0
      %455 = vmatpush1.bf16.msra.mxu0 0
      %456 = vmatprep.subr.bf16.mxu0 0
      %457 = vmatpush1.bf16.msra.mxu0 0
      %458 = vmatprep.subr.bf16.mxu0 0
      %459 = vmatpush1.bf16.msra.mxu0 0
      %460 = vmatprep.subr.bf16.mxu0 0
      %461 = vmatpush1.bf16.msra.mxu0 0
      %462 = vmatprep.subr.bf16.mxu0 0
      %463 = vmatpush1.bf16.msra.mxu0 0
      %464 = vmatprep.subr.bf16.mxu0 0
      %465 = vmatpush1.bf16.msra.mxu0 0
      %466 = vmatprep.subr.bf16.mxu0 0
      %467 = vmatpush1.bf16.msra.mxu0 0
      %468 = vmatprep.subr.bf16.mxu0 0
      %469 = vmatpush1.bf16.msra.mxu0 0
      %470 = vmatprep.subr.bf16.mxu0 0
      %471 = vmatpush1.bf16.msra.mxu0 0
      %472 = vmatprep.subr.bf16.mxu0 0
      %473 = vmatpush1.bf16.msra.mxu0 0
      %474 = vmatprep.subr.bf16.mxu0 0
      %475 = vmatpush1.bf16.msra.mxu0 0
      %476 = vmatprep.subr.bf16.mxu0 0
      %477 = vmatpush1.bf16.msra.mxu0 0
      %478 = vmatprep.subr.bf16.mxu0 0
      %479 = vmatpush1.bf16.msra.mxu0 0
      %480 = vmatprep.mubr.bf16.mxu0 0
      %481 = vmatmul.mubr.bf16.gmra.mrb[0].mxu0 %v442
      %v482 = vpop.f32.mrb[0].mxu0
      %v483 = vadd.f32 0.0, %v482
      %v484 = vpop.f32.mrb[0].mxu0
      %v485 = vpop.f32.mrb[0].mxu0
      %v486 = vpop.f32.mrb[0].mxu0
      %487 = vdwg.mxu0
      %v488 = vadd.f32 %v439, %v483
      %489 = vst [vmem:[#allocation5] sm:$0xff] %v488
      %490 = vst.msk [vmem:[#allocation2] sm:$0xff] %vm431, %v413
      // Predicated region
      $region41: #{simplex_attention.3} parent=35 // pred_check
        %p491 = pneg %p328
      $region42: #{simplex_attention.3} parent=35 // pred_check_branch
        %493 = sbr.rel (%p491) target = $region44
      $region43: #{simplex_attention.3} parent=35 // pred_region
        %v494 = vld [vmem:[#allocation5] sm:$0xff]
        %v495 = vld [vmem:[#allocation3] sm:$0xff]
        %v496 = vrcp.pop %v495
        %498 = vset.pattern.permute.xlu0 0
        %499 = vperm.xlu0 %498, %v496
        %v500 = vpop.permute.xlu0 %499
        %v502 = vmul.f32 %v494, %v500
        %v503 = vpack.c.bf16 %v502, %v502
        %504 = vst [vmem:[%s325] sm:$0xf] %v503
      $region44: #{simplex_attention.3} parent=35 // pred_fallthru
        _
      %p505 = scmp.lt.s32.totalorder %s20, 1
      %s506 = scalar_select %p505, %s20, 1
      %p507 = scmp.lt.s32.totalorder %s21, 0
      %s508 = scalar_select %p507, %s21, 0
      %s509 = sadd.s32 %s508, %s506
      %s510 = smul.addr %s509, 4
      %s511 = scalar_lea.vmem %s4, %s510
      // Predicated region
      $region45: #{simplex_attention.3} parent=35 // pred_check
        %p512 = pneg %p170
      $region46: #{simplex_attention.3} parent=35 // pred_check_branch
        %514 = sbr.rel (%p512) target = $region48
      $region47: #{simplex_attention.3} parent=35 // pred_region
        _
      $region48: #{simplex_attention.3} parent=35 // pred_fallthru
        _
    $region36: #{simplex_attention.3} parent=5 // pred_fallthru
      _
    %p515 = scmp.le.s32.totalorder 2, %s10
    // Predicated region
    $region49: #{simplex_attention.3} parent=5 // pred_check
      %p516 = pneg %p515
    $region50: #{simplex_attention.3} parent=5 // pred_check_branch
      %518 = sbr.rel (%p516) target = $region52
    $region51: #{simplex_attention.3} parent=5 // pred_region
      %s519 = ssub.s32 %s10, 2
      // Predicated region
      $region53: #{simplex_attention.3} parent=51 // pred_check
        %p520 = pneg %p176
      $region54: #{simplex_attention.3} parent=51 // pred_check_branch
        %522 = sbr.rel (%p520) target = $region56
      $region55: #{simplex_attention.3} parent=51 // pred_region
        %p523 = scmp.lt.s32.totalorder %s23, 1
        %s524 = scalar_select %p523, %s23, 1
        %p525 = scmp.lt.s32.totalorder %s24, 0
        %s526 = scalar_select %p525, %s24, 0
        %s527 = sadd.s32 %s526, %s524
        %s528 = smul.addr %s527, 4
        %s529 = scalar_lea.vmem %s4, %s528
      $region56: #{simplex_attention.3} parent=51 // pred_fallthru
        _
    $region52: #{simplex_attention.3} parent=5 // pred_fallthru
      _
  $region6: #{simplex_attention.3} parent=0 // loop_footer
    %s14 = sadd.s32 1, %s10
  $region7: #{simplex_attention.3} parent=0 // loop_footer_branch
    %9 = sbr.rel target = $region3
  $region8: #{simplex_attention.3} parent=0 // loop_exit
    _

// kernel: simplex_attention.2
$region0: #{simplex_attention.2}
  #allocation0 [shape = 'u32[]', space=smem, size = 0x4, offset = 0x4, fixed_abs, tag = 'smem constant byte address 0x4 - core index']
  #allocation1 [shape = 'u32[144,128]{1,0:T(1,128)}', space=vmem, size = 0x12000, scoped, tag = 'internal scratch']
  #allocation2 [shape = 'bf16[2,128]{1,0:T(2,128)(2,1)}', space=vmem, size = 0x200, scoped, tag = 'scratch operand']
  %s0 = inlined_call_operand.vmem [shape: bf16[4,8,128], index: 0, kind: input, shape index: {}]
  %s1 = inlined_call_operand.vmem [shape: bf16[384,128], index: 1, kind: input, shape index: {}]
  %s2 = inlined_call_operand.vmem [shape: f32[1,128], index: 2, kind: input, shape index: {}]
  %s3 = inlined_call_operand.vmem [shape: bf16[4,8,128], index: 3, kind: output, shape index: {0}]
  %s4 = inlined_call_operand.vmem [shape: f32[4,1,8], index: 4, kind: output, shape index: {1}]
  %5 = xla_tuple %s3, %s4
  %s6 = sld [smem:[#allocation0]]
  $region57: #{simplex_attention.2} parent=0
    _
  %s8 = ssub.s32 1, %s6
  %s9 = scalar_select 0, %s8, %s6
  loop: start=0, step=1, limit=6
  $region2: #{simplex_attention.2} parent=0 // loop_pre_header
    _
  $region3: #{simplex_attention.2} parent=0 // loop_header
    %s11 = sphi 0, %s15
    %p12 = scmp.ge.s32.totalorder %s11, 6
    %s18 = sphi 0, %s30
    %s19 = sphi 0, %s26
    %s20 = sphi 0, %s18
    %s21 = sphi 0, %s19
    %s22 = sphi 0, %s20
    %s23 = sphi 0, %s21
    %s35 = sphi 0, %s37
    %s38 = sphi 0, %s35
    %s39 = sphi 0, %s38
    %s55 = sphi 0, %s39
    %s59 = sphi 0, %s59
    %s61 = sphi 0, %s59
    %s62 = sphi 0, %s61
    %s76 = sphi 0, %s62
    %s80 = sphi 0, %s80
    %s82 = sphi 0, %s80
    %s83 = sphi 0, %s82
    %s97 = sphi 0, %s83
    %s105 = sphi 0, %s107
    %s108 = sphi 0, %s105
    %s109 = sphi 0, %s108
    %s125 = sphi 0, %s109
    %s133 = sphi 0, %s135
    %s136 = sphi 0, %s133
    %s137 = sphi 0, %s136
    %s153 = sphi 0, %s137
  $region4: #{simplex_attention.2} parent=0 // loop_header_branch
    %14 = sbr.rel (%p12) target = $region8
  $region5: #{simplex_attention.2} parent=0 // loop_body
    %s16 = ssub.s32 %s11, 1
    %s17 = ssub.s32 %s11, 2
    %s24 = sadd.s32 1, %s19
    %p25 = scmp.ge.s32.totalorder %s24, 1
    %s26 = scalar_select %p25, 0, %s24
    %s27 = sadd.s32 1, %s18
    %s28 = scalar_select %p25, %s27, %s18
    %p29 = scmp.ge.s32.totalorder %s28, 4
    %s30 = scalar_select %p29, 0, %s28
    %s31 = ssub.s32 %s18, %s30
    %s32 = ssub.s32 %s19, %s26
    %s33 = sor.u32 %s31, %s32
    %p34 = scmp.eq.s32.totalorder %s33, 0
    %s36 = sadd.s32 %s35, 1
    %s37 = scalar_select %p34, %s35, %s36
    %p40 = pneg %p34
    %p41 = scmp.eq.s32.totalorder %s11, 3
    %p42 = por %p40, %p41
    %p43 = scmp.ne.s32.totalorder %s35, %s38
    %p44 = scmp.eq.s32.totalorder %s11, 0
    %p45 = por %p43, %p44
    %p46 = scmp.ne.s32.totalorder %s35, %s38
    %p47 = scmp.eq.s32.totalorder %s16, 3
    %p48 = por %p46, %p47
    %p49 = scmp.ne.s32.totalorder %s38, %s39
    %p50 = scmp.eq.s32.totalorder %s16, 0
    %p51 = por %p49, %p50
    %p52 = scmp.ne.s32.totalorder %s38, %s39
    %p53 = scmp.eq.s32.totalorder %s17, 3
    %p54 = por %p52, %p53
    %p56 = scmp.ne.s32.totalorder %s39, %s55
    %p57 = scmp.eq.s32.totalorder %s17, 0
    %p58 = por %p56, %p57
    %s60 = sadd.s32 %s59, 1
    %p63 = scmp.eq.s32.totalorder %s11, 3
    %p64 = scmp.ne.s32.totalorder %s59, %s61
    %p65 = scmp.eq.s32.totalorder %s11, 0
    %p66 = por %p64, %p65
    %p67 = scmp.ne.s32.totalorder %s59, %s61
    %p68 = scmp.eq.s32.totalorder %s16, 3
    %p69 = por %p67, %p68
    %p70 = scmp.ne.s32.totalorder %s61, %s62
    %p71 = scmp.eq.s32.totalorder %s16, 0
    %p72 = por %p70, %p71
    %p73 = scmp.ne.s32.totalorder %s61, %s62
    %p74 = scmp.eq.s32.totalorder %s17, 3
    %p75 = por %p73, %p74
    %p77 = scmp.ne.s32.totalorder %s62, %s76
    %p78 = scmp.eq.s32.totalorder %s17, 0
    %p79 = por %p77, %p78
    %s81 = sadd.s32 %s80, 1
    %p84 = scmp.eq.s32.totalorder %s11, 3
    %p85 = scmp.ne.s32.totalorder %s80, %s82
    %p86 = scmp.eq.s32.totalorder %s11, 0
    %p87 = por %p85, %p86
    %p88 = scmp.ne.s32.totalorder %s80, %s82
    %p89 = scmp.eq.s32.totalorder %s16, 3
    %p90 = por %p88, %p89
    %p91 = scmp.ne.s32.totalorder %s82, %s83
    %p92 = scmp.eq.s32.totalorder %s16, 0
    %p93 = por %p91, %p92
    %p94 = scmp.ne.s32.totalorder %s82, %s83
    %p95 = scmp.eq.s32.totalorder %s17, 3
    %p96 = por %p94, %p95
    %p98 = scmp.ne.s32.totalorder %s83, %s97
    %p99 = scmp.eq.s32.totalorder %s17, 0
    %p100 = por %p98, %p99
    %s101 = ssub.s32 %s18, %s30
    %s102 = ssub.s32 %s19, %s26
    %s103 = sor.u32 %s101, %s102
    %p104 = scmp.eq.s32.totalorder %s103, 0
    %s106 = sadd.s32 %s105, 1
    %s107 = scalar_select %p104, %s105, %s106
    %p110 = pneg %p104
    %p111 = scmp.eq.s32.totalorder %s11, 3
    %p112 = por %p110, %p111
    %p113 = scmp.ne.s32.totalorder %s105, %s108
    %p114 = scmp.eq.s32.totalorder %s11, 0
    %p115 = por %p113, %p114
    %p116 = scmp.ne.s32.totalorder %s105, %s108
    %p117 = scmp.eq.s32.totalorder %s16, 3
    %p118 = por %p116, %p117
    %p119 = scmp.ne.s32.totalorder %s108, %s109
    %p120 = scmp.eq.s32.totalorder %s16, 0
    %p121 = por %p119, %p120
    %p122 = scmp.ne.s32.totalorder %s108, %s109
    %p123 = scmp.eq.s32.totalorder %s17, 3
    %p124 = por %p122, %p123
    %p126 = scmp.ne.s32.totalorder %s109, %s125
    %p127 = scmp.eq.s32.totalorder %s17, 0
    %p128 = por %p126, %p127
    %s129 = ssub.s32 %s18, %s30
    %s130 = ssub.s32 %s19, %s26
    %s131 = sor.u32 %s129, %s130
    %p132 = scmp.eq.s32.totalorder %s131, 0
    %s134 = sadd.s32 %s133, 1
    %s135 = scalar_select %p132, %s133, %s134
    %p138 = pneg %p132
    %p139 = scmp.eq.s32.totalorder %s11, 3
    %p140 = por %p138, %p139
    %p141 = scmp.ne.s32.totalorder %s133, %s136
    %p142 = scmp.eq.s32.totalorder %s11, 0
    %p143 = por %p141, %p142
    %p144 = scmp.ne.s32.totalorder %s133, %s136
    %p145 = scmp.eq.s32.totalorder %s16, 3
    %p146 = por %p144, %p145
    %p147 = scmp.ne.s32.totalorder %s136, %s137
    %p148 = scmp.eq.s32.totalorder %s16, 0
    %p149 = por %p147, %p148
    %p150 = scmp.ne.s32.totalorder %s136, %s137
    %p151 = scmp.eq.s32.totalorder %s17, 3
    %p152 = por %p150, %p151
    %p154 = scmp.ne.s32.totalorder %s137, %s153
    %p155 = scmp.eq.s32.totalorder %s17, 0
    %p156 = por %p154, %p155
    %p157 = scmp.le.s32.totalorder 1, %s11
    %p158 = scmp.lt.s32.totalorder %s11, 5
    %p159 = pnand %p157, %p158
    %p160 = pneg %p159
    // Predicated region
    $region9: #{simplex_attention.2} parent=5 // pred_check
      _
    $region10: #{simplex_attention.2} parent=5 // pred_check_branch
      %162 = sbr.rel (%p159) target = $region12
    $region11: #{simplex_attention.2} parent=5 // pred_region
      %s163 = ssub.s32 %s11, 1
      // Predicated region
      $region13: #{simplex_attention.2} parent=11 // pred_check
        %p164 = pneg %p72
      $region14: #{simplex_attention.2} parent=11 // pred_check_branch
        %166 = sbr.rel (%p164) target = $region16
      $region15: #{simplex_attention.2} parent=11 // pred_region
        _
      $region16: #{simplex_attention.2} parent=11 // pred_fallthru
        _
      // Predicated region
      $region17: #{simplex_attention.2} parent=11 // pred_check
        %p167 = pneg %p93
      $region18: #{simplex_attention.2} parent=11 // pred_check_branch
        %169 = sbr.rel (%p167) target = $region20
      $region19: #{simplex_attention.2} parent=11 // pred_region
        _
      $region20: #{simplex_attention.2} parent=11 // pred_fallthru
        _
    $region12: #{simplex_attention.2} parent=5 // pred_fallthru
      _
    %p170 = scmp.lt.s32.totalorder %s11, 4
    // Predicated region
    $region21: #{simplex_attention.2} parent=5 // pred_check
      %p171 = pneg %p170
    $region22: #{simplex_attention.2} parent=5 // pred_check_branch
      %173 = sbr.rel (%p171) target = $region24
    $region23: #{simplex_attention.2} parent=5 // pred_region
      // Predicated region
      $region25: #{simplex_attention.2} parent=23 // pred_check
        %p174 = pneg %p45
      $region26: #{simplex_attention.2} parent=23 // pred_check_branch
        %176 = sbr.rel (%p174) target = $region28
      $region27: #{simplex_attention.2} parent=23 // pred_region
        %p177 = scmp.lt.s32.totalorder %s18, 3
        %s178 = scalar_select %p177, %s18, 3
        %p179 = scmp.lt.s32.totalorder %s19, 0
        %s180 = scalar_select %p179, %s19, 0
        %s181 = sadd.s32 %s180, %s178
        %s182 = smul.addr %s181, 4
        %s183 = scalar_lea.vmem %s0, %s182
      $region28: #{simplex_attention.2} parent=23 // pred_fallthru
        _
    $region24: #{simplex_attention.2} parent=5 // pred_fallthru
      _
    %p184 = scmp.le.s32.totalorder 1, %s11
    %p185 = scmp.lt.s32.totalorder %s11, 5
    %p186 = pnand %p184, %p185
    %p187 = pneg %p186
    // Predicated region
    $region29: #{simplex_attention.2} parent=5 // pred_check
      _
    $region30: #{simplex_attention.2} parent=5 // pred_check_branch
      %189 = sbr.rel (%p186) target = $region32
    $region31: #{simplex_attention.2} parent=5 // pred_region
      %s190 = ssub.s32 %s11, 1
      %p191 = scmp.lt.s32.totalorder %s20, 3
      %s192 = scalar_select %p191, %s20, 3
      %p193 = scmp.lt.s32.totalorder %s21, 0
      %s194 = scalar_select %p193, %s21, 0
      %s195 = sadd.s32 %s194, %s192
      %s196 = smul.addr %s195, 4
      %s197 = scalar_lea.vmem %s0, %s196
      %p198 = pneg %p51
      %p199 = pneg %p48
      %p200 = pneg %p72
      %p201 = pneg %p69
      %p202 = pneg %p93
      %p203 = pneg %p90
      %p204 = pneg %p121
      %p205 = pneg %p118
      %p206 = scmp.lt.s32.totalorder %s20, 3
      %s207 = scalar_select %p206, %s20, 3
      %p208 = scmp.lt.s32.totalorder %s21, 0
      %s209 = scalar_select %p208, %s21, 0
      %s210 = sadd.s32 %s209, %s207
      %s211 = smul.addr %s210, 4
      %s212 = scalar_lea.vmem %s3, %s211
      %p213 = pneg %p149
      %p214 = pneg %p146
      %p215 = scmp.lt.s32.totalorder %s20, 3
      %s216 = scalar_select %p215, %s20, 3
      %p217 = scmp.lt.s32.totalorder %s21, 0
      %s218 = scalar_select %p217, %s21, 0
      %s219 = sadd.s32 %s218, %s216
      %s220 = scalar_lea.vmem %s4, %s219
      %p221 = scmp.lt.s32.totalorder %s20, 3
      %s222 = scalar_select %p221, %s20, 3
      %p223 = scmp.lt.s32.totalorder %s21, 0
      %s224 = scalar_select %p223, %s21, 0
      %s225 = sadd.s32 %s224, %s222
      %s226 = smul.addr %s225, 4
      %s227 = scalar_lea.vmem %s0, %s226
      %p228 = scmp.lt.s32.totalorder %s20, 3
      %s229 = scalar_select %p228, %s20, 3
      %p230 = scmp.lt.s32.totalorder %s21, 0
      %s231 = scalar_select %p230, %s21, 0
      %s232 = sadd.s32 %s231, %s229
      %s233 = smul.addr %s232, 4
      %s234 = scalar_lea.vmem %s3, %s233
      %p235 = scmp.lt.s32.totalorder %s20, 3
      %s236 = scalar_select %p235, %s20, 3
      %p237 = scmp.lt.s32.totalorder %s21, 0
      %s238 = scalar_select %p237, %s21, 0
      %s239 = sadd.s32 %s238, %s236
      %s240 = scalar_lea.vmem %s4, %s239
      %v242 = vld [vmem:[%s227] sm:$0xf]
      %v243 = vld [vmem:[%s1] sm:$0xf]
      %v244 = vld [vmem:[%s1 + $0x4] sm:$0xf]
      %v245 = vld [vmem:[%s1 + $0x8] sm:$0xf]
      %v246 = vld [vmem:[%s1 + $0xc] sm:$0xf]
      %v247 = vld [vmem:[%s1 + $0x10] sm:$0xf]
      %v248 = vld [vmem:[%s1 + $0x14] sm:$0xf]
      %v249 = vld [vmem:[%s1 + $0x18] sm:$0xf]
      %v250 = vld [vmem:[%s1 + $0x1c] sm:$0xf]
      %v251 = vld [vmem:[%s1 + $0x20] sm:$0xf]
      %v252 = vld [vmem:[%s1 + $0x24] sm:$0xf]
      %v253 = vld [vmem:[%s1 + $0x28] sm:$0xf]
      %v254 = vld [vmem:[%s1 + $0x2c] sm:$0xf]
      %v255 = vld [vmem:[%s1 + $0x30] sm:$0xf]
      %v256 = vld [vmem:[%s1 + $0x34] sm:$0xf]
      %v257 = vld [vmem:[%s1 + $0x38] sm:$0xf]
      %v258 = vld [vmem:[%s1 + $0x3c] sm:$0xf]
      %v259 = vld [vmem:[%s1 + $0x40] sm:$0xf]
      %v260 = vld [vmem:[%s1 + $0x44] sm:$0xf]
      %v261 = vld [vmem:[%s1 + $0x48] sm:$0xf]
      %v262 = vld [vmem:[%s1 + $0x4c] sm:$0xf]
      %v263 = vld [vmem:[%s1 + $0x50] sm:$0xf]
      %v264 = vld [vmem:[%s1 + $0x54] sm:$0xf]
      %v265 = vld [vmem:[%s1 + $0x58] sm:$0xf]
      %v266 = vld [vmem:[%s1 + $0x5c] sm:$0xf]
      %v267 = vld [vmem:[%s1 + $0x60] sm:$0xf]
      %v268 = vld [vmem:[%s1 + $0x64] sm:$0xf]
      %v269 = vld [vmem:[%s1 + $0x68] sm:$0xf]
      %v270 = vld [vmem:[%s1 + $0x6c] sm:$0xf]
      %v271 = vld [vmem:[%s1 + $0x70] sm:$0xf]
      %v272 = vld [vmem:[%s1 + $0x74] sm:$0xf]
      %v273 = vld [vmem:[%s1 + $0x78] sm:$0xf]
      %v274 = vld [vmem:[%s1 + $0x7c] sm:$0xf]
      %v275 = vld [vmem:[%s1 + $0x80] sm:$0xf]
      %v276 = vld [vmem:[%s1 + $0x84] sm:$0xf]
      %v277 = vld [vmem:[%s1 + $0x88] sm:$0xf]
      %v278 = vld [vmem:[%s1 + $0x8c] sm:$0xf]
      %v279 = vld [vmem:[%s1 + $0x90] sm:$0xf]
      %v280 = vld [vmem:[%s1 + $0x94] sm:$0xf]
      %v281 = vld [vmem:[%s1 + $0x98] sm:$0xf]
      %v282 = vld [vmem:[%s1 + $0x9c] sm:$0xf]
      %v283 = vld [vmem:[%s1 + $0xa0] sm:$0xf]
      %v284 = vld [vmem:[%s1 + $0xa4] sm:$0xf]
      %v285 = vld [vmem:[%s1 + $0xa8] sm:$0xf]
      %v286 = vld [vmem:[%s1 + $0xac] sm:$0xf]
      %v287 = vld [vmem:[%s1 + $0xb0] sm:$0xf]
      %v288 = vld [vmem:[%s1 + $0xb4] sm:$0xf]
      %v289 = vld [vmem:[%s1 + $0xb8] sm:$0xf]
      %v290 = vld [vmem:[%s1 + $0xbc] sm:$0xf]
      %v291 = vld [vmem:[%s2] sm:$0x1]
      %p292 = scmp.eq.s32.totalorder %s21, 0
      // Predicated region
      $region33: #{simplex_attention.2} parent=31 // pred_check
        %p293 = pneg %p292
      $region34: #{simplex_attention.2} parent=31 // pred_check_branch
        %295 = sbr.rel (%p293) target = $region36
      $region35: #{simplex_attention.2} parent=31 // pred_region
        %v297 = vpack.i.b16 %v242, %v242
        %v299 = vlaneseq
        %v300 = vshrl.u32 %v299, 7
        %v301 = vsub.s32 0, %v300
        %v302 = vrot.slane %v297, %v301
        %303 = vst [vmem:[#allocation2] sm:$0x1] %v302
      $region36: #{simplex_attention.2} parent=31 // pred_fallthru
        _
      %v304 = vld [vmem:[#allocation2] sm:$0x1]
      %v306 = vunpack.c.l.b16 %v242
      %v307 = vpack.c.b16 %v306, %v306
      %v308 = vrot.slane %v307, 7
      %vm309 = vcmask 1040384
      %v312 = vsel %vm309, %v304, %v308
      %v315 = vunpack.c.l.s4 1966171168
      %v316 = vunpack.c.0.s8 %v315
      %v317 = vlaneseq
      %v318 = vshrl.u32 %v317, 7
      %v319 = vsub.s32 %v316, %v318
      %v320 = vrot.slane %v242, %v319
      %v321 = vcombine.high %v320, %v320
      %v323 = vunpack.c.l.s4 1966171168
      %v324 = vunpack.c.0.s8 %v323
      %v325 = vlaneseq
      %v326 = vshrl.u32 %v325, 7
      %v327 = vsub.s32 %v324, %v326
      %v328 = vrot.slane %v321, %v327
      %v329 = vcombine.high %v328, %v328
      %331 = vst [vmem:[#allocation2] sm:$0x1] %v329
      %v332 = vshrl.u32 %v312, 16
      %v334 = vshll.u32 %v312, 16
      %v336 = vrot.slane %v334, 1
      %v337 = vor.u32 %v332, %v336
      %v340 = vrot.slane %v312, 1
      %v343 = vlaneseq
      %v344 = vshrl.u32 %v343, 7
      %v345 = vsub.s32 0, %v344
      %v346 = vrot.slane %v291, %v345
      %v396 = vunpack.c.l.b16 %v243
      %v397 = vunpack.c.l.b16 %v244
      %v398 = vunpack.c.l.b16 %v245
      %v399 = vunpack.c.l.b16 %v246
      %v400 = vunpack.c.l.b16 %v247
      %v401 = vunpack.c.l.b16 %v248
      %v402 = vunpack.c.l.b16 %v249
      %v403 = vunpack.c.l.b16 %v250
      %v404 = vunpack.c.l.b16 %v251
      %v405 = vunpack.c.l.b16 %v252
      %v406 = vunpack.c.l.b16 %v253
      %v407 = vunpack.c.l.b16 %v254
      %v408 = vunpack.c.l.b16 %v255
      %v409 = vunpack.c.l.b16 %v256
      %v410 = vunpack.c.l.b16 %v257
      %v411 = vunpack.c.l.b16 %v258
      %v412 = vunpack.c.l.b16 %v259
      %v413 = vunpack.c.l.b16 %v260
      %v414 = vunpack.c.l.b16 %v261
      %v415 = vunpack.c.l.b16 %v262
      %v416 = vunpack.c.l.b16 %v263
      %v417 = vunpack.c.l.b16 %v264
      %v418 = vunpack.c.l.b16 %v265
      %v419 = vunpack.c.l.b16 %v266
      %v420 = vunpack.c.l.b16 %v267
      %v421 = vunpack.c.l.b16 %v268
      %v422 = vunpack.c.l.b16 %v269
      %v423 = vunpack.c.l.b16 %v270
      %v424 = vunpack.c.l.b16 %v271
      %v425 = vunpack.c.l.b16 %v272
      %v426 = vunpack.c.l.b16 %v273
      %v427 = vunpack.c.l.b16 %v274
      %v428 = vunpack.c.l.b16 %v275
      %v429 = vunpack.c.l.b16 %v276
      %v430 = vunpack.c.l.b16 %v277
      %v431 = vunpack.c.l.b16 %v278
      %v432 = vunpack.c.l.b16 %v279
      %v433 = vunpack.c.l.b16 %v280
      %v434 = vunpack.c.l.b16 %v281
      %v435 = vunpack.c.l.b16 %v282
      %v436 = vunpack.c.l.b16 %v283
      %v437 = vunpack.c.l.b16 %v284
      %v438 = vunpack.c.l.b16 %v285
      %v439 = vunpack.c.l.b16 %v286
      %v440 = vunpack.c.l.b16 %v287
      %v441 = vunpack.c.l.b16 %v288
      %v442 = vunpack.c.l.b16 %v289
      %v443 = vunpack.c.l.b16 %v290
      %v444 = vpack.c.b16 %v397, %v396
      %v445 = vpack.c.b16 %v399, %v398
      %v446 = vpack.c.b16 %v401, %v400
      %v447 = vpack.c.b16 %v403, %v402
      %v448 = vpack.c.b16 %v405, %v404
      %v449 = vpack.c.b16 %v407, %v406
      %v450 = vpack.c.b16 %v409, %v408
      %v451 = vpack.c.b16 %v411, %v410
      %v452 = vpack.c.b16 %v413, %v412
      %v453 = vpack.c.b16 %v415, %v414
      %v454 = vpack.c.b16 %v417, %v416
      %v455 = vpack.c.b16 %v419, %v418
      %v456 = vpack.c.b16 %v421, %v420
      %v457 = vpack.c.b16 %v423, %v422
      %v458 = vpack.c.b16 %v425, %v424
      %v459 = vpack.c.b16 %v427, %v426
      %v460 = vpack.c.b16 %v429, %v428
      %v461 = vpack.c.b16 %v431, %v430
      %v462 = vpack.c.b16 %v433, %v432
      %v463 = vpack.c.b16 %v435, %v434
      %v464 = vpack.c.b16 %v437, %v436
      %v465 = vpack.c.b16 %v439, %v438
      %v466 = vpack.c.b16 %v441, %v440
      %v467 = vpack.c.b16 %v443, %v442
      %492 = vmatprep.subr.bf16.mxu0 0
      %493 = vmatpush1.bf16.msra.mxu0 %v444
      %494 = vmatprep.subr.bf16.mxu0 0
      %495 = vmatpush1.bf16.msra.mxu0 %v445
      %496 = vmatprep.subr.bf16.mxu0 0
      %497 = vmatpush1.bf16.msra.mxu0 %v446
      %498 = vmatprep.subr.bf16.mxu0 0
      %499 = vmatpush1.bf16.msra.mxu0 %v447
      %500 = vmatprep.subr.bf16.mxu0 0
      %501 = vmatpush1.bf16.msra.mxu0 %v448
      %502 = vmatprep.subr.bf16.mxu0 0
      %503 = vmatpush1.bf16.msra.mxu0 %v449
      %504 = vmatprep.subr.bf16.mxu0 0
      %505 = vmatpush1.bf16.msra.mxu0 %v450
      %506 = vmatprep.subr.bf16.mxu0 0
      %507 = vmatpush1.bf16.msra.mxu0 %v451
      %508 = vmatprep.subr.bf16.mxu0 0
      %509 = vmatpush1.bf16.msra.mxu0 %v452
      %510 = vmatprep.subr.bf16.mxu0 0
      %511 = vmatpush1.bf16.msra.mxu0 %v453
      %512 = vmatprep.subr.bf16.mxu0 0
      %513 = vmatpush1.bf16.msra.mxu0 %v454
      %514 = vmatprep.subr.bf16.mxu0 0
      %515 = vmatpush1.bf16.msra.mxu0 %v455
      %516 = vmatprep.subr.bf16.mxu0 0
      %517 = vmatpush1.bf16.msra.mxu0 %v456
      %518 = vmatprep.subr.bf16.mxu0 0
      %519 = vmatpush1.bf16.msra.mxu0 %v457
      %520 = vmatprep.subr.bf16.mxu0 0
      %521 = vmatpush1.bf16.msra.mxu0 %v458
      %522 = vmatprep.subr.bf16.mxu0 0
      %523 = vmatpush1.bf16.msra.mxu0 %v459
      %524 = vmatprep.mubr.bf16.mxu0 %v337
      %525 = vmatmul.mubr.bf16.gmra.mrb[0].mxu0 %v312
      %v526 = vpop.f32.mrb[0].mxu0
      %v527 = vadd.f32 %v346, %v526
      %v528 = vpop.f32.mrb[0].mxu0
      %v529 = vpop.f32.mrb[0].mxu0
      %v530 = vpop.f32.mrb[0].mxu0
      %531 = vdwg.mxu0
      %532 = vmatprep.subr.bf16.mxu0 0
      %533 = vmatpush1.bf16.msra.mxu0 %v460
      %534 = vmatprep.subr.bf16.mxu0 0
      %535 = vmatpush1.bf16.msra.mxu0 %v461
      %536 = vmatprep.subr.bf16.mxu0 0
      %537 = vmatpush1.bf16.msra.mxu0 %v462
      %538 = vmatprep.subr.bf16.mxu0 0
      %539 = vmatpush1.bf16.msra.mxu0 %v463
      %540 = vmatprep.subr.bf16.mxu0 0
      %541 = vmatpush1.bf16.msra.mxu0 %v464
      %542 = vmatprep.subr.bf16.mxu0 0
      %543 = vmatpush1.bf16.msra.mxu0 %v465
      %544 = vmatprep.subr.bf16.mxu0 0
      %545 = vmatpush1.bf16.msra.mxu0 %v466
      %546 = vmatprep.subr.bf16.mxu0 0
      %547 = vmatpush1.bf16.msra.mxu0 %v467
      %548 = vmatprep.subr.bf16.mxu0 0
      %549 = vmatpush1.bf16.msra.mxu0 0
      %550 = vmatprep.subr.bf16.mxu0 0
      %551 = vmatpush1.bf16.msra.mxu0 0
      %552 = vmatprep.subr.bf16.mxu0 0
      %553 = vmatpush1.bf16.msra.mxu0 0
      %554 = vmatprep.subr.bf16.mxu0 0
      %555 = vmatpush1.bf16.msra.mxu0 0
      %556 = vmatprep.subr.bf16.mxu0 0
      %557 = vmatpush1.bf16.msra.mxu0 0
      %558 = vmatprep.subr.bf16.mxu0 0
      %559 = vmatpush1.bf16.msra.mxu0 0
      %560 = vmatprep.subr.bf16.mxu0 0
      %561 = vmatpush1.bf16.msra.mxu0 0
      %562 = vmatprep.subr.bf16.mxu0 0
      %563 = vmatpush1.bf16.msra.mxu0 0
      %564 = vmatprep.mubr.bf16.mxu0 0
      %565 = vmatmul.mubr.bf16.gmra.mrb[0].mxu0 %v340
      %v566 = vpop.f32.mrb[0].mxu0
      %v567 = vadd.f32 %v527, %v566
      %v568 = vpop.f32.mrb[0].mxu0
      %v569 = vpop.f32.mrb[0].mxu0
      %v570 = vpop.f32.mrb[0].mxu0
      %571 = vdwg.mxu0
      %v572 = vpack.c.bf16 %v567, %v567
      %573 = vst [vmem:[%s234] sm:$0xf] %v572
      %v574 = vunpack.c.l.bf16 %v572
      %v575 = vmul.f32 %v574, %v574
      %576 = vmatprep.subr.mxu0 0.0
      %577 = vmatpush1.xpose.msra.mxu0 %v575
      %578 = vmatprep.subr.mxu0 0.0
      %579 = vmatpush1.xpose.msra.mxu0 0.0
      %580 = vmatprep.subr.mxu0 0.0
      %581 = vmatpush1.xpose.msra.mxu0 0.0
      %582 = vmatprep.subr.mxu0 0.0
      %583 = vmatpush1.xpose.msra.mxu0 0.0
      %584 = vmatprep.subr.mxu0 0.0
      %585 = vmatpush1.xpose.msra.mxu0 0.0
      %586 = vmatprep.subr.mxu0 0.0
      %587 = vmatpush1.xpose.msra.mxu0 0.0
      %588 = vmatprep.subr.mxu0 0.0
      %589 = vmatpush1.xpose.msra.mxu0 0.0
      %590 = vmatprep.subr.mxu0 0.0
      %591 = vmatpush1.xpose.msra.mxu0 0.0
      %592 = vmatprep.subr.mxu0 0.0
      %593 = vmatpush1.xpose.msra.mxu0 0.0
      %594 = vmatprep.subr.mxu0 0.0
      %595 = vmatpush1.xpose.msra.mxu0 0.0
      %596 = vmatprep.subr.mxu0 0.0
      %597 = vmatpush1.xpose.msra.mxu0 0.0
      %598 = vmatprep.subr.mxu0 0.0
      %599 = vmatpush1.xpose.msra.mxu0 0.0
      %600 = vmatprep.subr.mxu0 0.0
      %601 = vmatpush1.xpose.msra.mxu0 0.0
      %602 = vmatprep.subr.mxu0 0.0
      %603 = vmatpush1.xpose.msra.mxu0 0.0
      %604 = vmatprep.subr.mxu0 0.0
      %605 = vmatpush1.xpose.msra.mxu0 0.0
      %606 = vmatprep.subr.mxu0 0.0
      %607 = vmatpush1.xpose.msra.mxu0 0.0
      %608 = vmatprep.subr.mxu0 0.0
      %609 = vmatpush1.xpose.msra.mxu0 0.0
      %610 = vmatprep.subr.mxu0 0.0
      %611 = vmatpush1.xpose.msra.mxu0 0.0
      %612 = vmatprep.subr.mxu0 0.0
      %613 = vmatpush1.xpose.msra.mxu0 0.0
      %614 = vmatprep.subr.mxu0 0.0
      %615 = vmatpush1.xpose.msra.mxu0 0.0
      %616 = vmatprep.subr.mxu0 0.0
      %617 = vmatpush1.xpose.msra.mxu0 0.0
      %618 = vmatprep.subr.mxu0 0.0
      %619 = vmatpush1.xpose.msra.mxu0 0.0
      %620 = vmatprep.subr.mxu0 0.0
      %621 = vmatpush1.xpose.msra.mxu0 0.0
      %622 = vmatprep.subr.mxu0 0.0
      %623 = vmatpush1.xpose.msra.mxu0 0.0
      %624 = vmatprep.subr.mxu0 0.0
      %625 = vmatpush1.xpose.msra.mxu0 0.0
      %626 = vmatprep.subr.mxu0 0.0
      %627 = vmatpush1.xpose.msra.mxu0 0.0
      %628 = vmatprep.subr.mxu0 0.0
      %629 = vmatpush1.xpose.msra.mxu0 0.0
      %630 = vmatprep.subr.mxu0 0.0
      %631 = vmatpush1.xpose.msra.mxu0 0.0
      %632 = vmatprep.subr.mxu0 0.0
      %633 = vmatpush1.xpose.msra.mxu0 0.0
      %634 = vmatprep.subr.mxu0 0.0
      %635 = vmatpush1.xpose.msra.mxu0 0.0
      %636 = vmatprep.subr.mxu0 0.0
      %637 = vmatpush1.xpose.msra.mxu0 0.0
      %638 = vmatprep.subr.mxu0 0.0
      %639 = vmatpush1.xpose.msra.mxu0 0.0
      %640 = vmatprep.mubr.f32.mxu0 0.0
      %641 = vmatmul.mubr.f32.gmra.mrb[0].mxu0 1.0
      %v642 = vpop.f32.mrb[0].mxu0
      %v643 = vadd.f32 0.0, %v642
      %v644 = vpop.f32.mrb[0].mxu0
      %645 = vdwg.mxu0
      %vm646 = vcmask 57344
      %647 = vst.msk [vmem:[%s240] sm:$0x1] %vm646, %v643
      %p648 = scmp.lt.s32.totalorder %s20, 3
      %s649 = scalar_select %p648, %s20, 3
      %p650 = scmp.lt.s32.totalorder %s21, 0
      %s651 = scalar_select %p650, %s21, 0
      %s652 = sadd.s32 %s651, %s649
      %s653 = smul.addr %s652, 4
      %s654 = scalar_lea.vmem %s3, %s653
      %p655 = scmp.lt.s32.totalorder %s20, 3
      %s656 = scalar_select %p655, %s20, 3
      %p657 = scmp.lt.s32.totalorder %s21, 0
      %s658 = scalar_select %p657, %s21, 0
      %s659 = sadd.s32 %s658, %s656
      %s660 = scalar_lea.vmem %s4, %s659
      // Predicated region
      $region37: #{simplex_attention.2} parent=31 // pred_check
        %p661 = pneg %p118
      $region38: #{simplex_attention.2} parent=31 // pred_check_branch
        %663 = sbr.rel (%p661) target = $region40
      $region39: #{simplex_attention.2} parent=31 // pred_region
        _
      $region40: #{simplex_attention.2} parent=31 // pred_fallthru
        _
      // Predicated region
      $region41: #{simplex_attention.2} parent=31 // pred_check
        %p664 = pneg %p146
      $region42: #{simplex_attention.2} parent=31 // pred_check_branch
        %666 = sbr.rel (%p664) target = $region44
      $region43: #{simplex_attention.2} parent=31 // pred_region
        _
      $region44: #{simplex_attention.2} parent=31 // pred_fallthru
        _
    $region32: #{simplex_attention.2} parent=5 // pred_fallthru
      _
    %p667 = scmp.le.s32.totalorder 2, %s11
    // Predicated region
    $region45: #{simplex_attention.2} parent=5 // pred_check
      %p668 = pneg %p667
    $region46: #{simplex_attention.2} parent=5 // pred_check_branch
      %670 = sbr.rel (%p668) target = $region48
    $region47: #{simplex_attention.2} parent=5 // pred_region
      %s671 = ssub.s32 %s11, 2
      // Predicated region
      $region49: #{simplex_attention.2} parent=47 // pred_check
        %p672 = pneg %p124
      $region50: #{simplex_attention.2} parent=47 // pred_check_branch
        %674 = sbr.rel (%p672) target = $region52
      $region51: #{simplex_attention.2} parent=47 // pred_region
        %p675 = scmp.lt.s32.totalorder %s22, 3
        %s676 = scalar_select %p675, %s22, 3
        %p677 = scmp.lt.s32.totalorder %s23, 0
        %s678 = scalar_select %p677, %s23, 0
        %s679 = sadd.s32 %s678, %s676
        %s680 = smul.addr %s679, 4
        %s681 = scalar_lea.vmem %s3, %s680
      $region52: #{simplex_attention.2} parent=47 // pred_fallthru
        _
      // Predicated region
      $region53: #{simplex_attention.2} parent=47 // pred_check
        %p682 = pneg %p152
      $region54: #{simplex_attention.2} parent=47 // pred_check_branch
        %684 = sbr.rel (%p682) target = $region56
      $region55: #{simplex_attention.2} parent=47 // pred_region
        %p685 = scmp.lt.s32.totalorder %s22, 3
        %s686 = scalar_select %p685, %s22, 3
        %p687 = scmp.lt.s32.totalorder %s23, 0
        %s688 = scalar_select %p687, %s23, 0
        %s689 = sadd.s32 %s688, %s686
        %s690 = scalar_lea.vmem %s4, %s689
      $region56: #{simplex_attention.2} parent=47 // pred_fallthru
        _
    $region48: #{simplex_attention.2} parent=5 // pred_fallthru
      _
  $region6: #{simplex_attention.2} parent=0 // loop_footer
    %s15 = sadd.s32 1, %s11
  $region7: #{simplex_attention.2} parent=0 // loop_footer_branch
    %10 = sbr.rel target = $region3
  $region8: #{simplex_attention.2} parent=0 // loop_exit
    _

</llo_original>
